<compile_context>
chip_gen: v6e
topology: v6e:2x2x1
jax: 0.10.0
libtpu: 0.0.40
codegen_flags: <defaults>
</compile_context>

<pallas_src>
import functools

import jax
import jax.numpy as jnp
from jax.experimental import pallas as pl
from jax.experimental.pallas import tpu as pltpu

IN_DIM = 512       # hardcoded in Branch: ProjectionMLP(512, ...)
HIDDEN_DIM = 256   # args.dim_proj[0] (synthetic choice)
OUT_DIM = 128      # args.dim_proj[1] (synthetic choice)
BN_EPS = 1e-5

_VMEM_LIMIT = 32 * 1024 * 1024  # safe headroom on v5e / v6e / v7x


def _linear_stats_kernel(x_ref, w_ref, y_ref, stats_ref):
    """y = x @ w (bf16 MXU, f32 acc); accumulate column sum / sum-of-squares of y."""
    @pl.when(pl.program_id(0) == 0)
    def _():
        stats_ref[...] = jnp.zeros_like(stats_ref)

    y = jnp.dot(x_ref[...].astype(jnp.bfloat16), w_ref[...],
                preferred_element_type=jnp.float32)
    y_ref[...] = y.astype(y_ref.dtype)
    col_sum = jnp.sum(y, axis=0, keepdims=True)
    col_sq = jnp.sum(y * y, axis=0, keepdims=True)
    stats_ref[...] += jnp.concatenate([col_sum, col_sq], axis=0)


def _bn_relu_linear_stats_kernel(h_ref, stats1_ref, gamma_ref, beta_ref, w_ref,
                                 z_ref, stats2_ref, *, batch):
    """z = relu(bn1(h)) @ w2 (bf16 MXU); accumulate column stats of z."""
    @pl.when(pl.program_id(0) == 0)
    def _():
        stats2_ref[...] = jnp.zeros_like(stats2_ref)

    # Fold BN1 into per-column scale/shift (one-pass stats, biased variance).
    s1 = stats1_ref[...]
    inv_b = jnp.float32(1.0 / batch)
    mean = s1[0:1, :] * inv_b
    var = s1[1:2, :] * inv_b - mean * mean
    scale = gamma_ref[...] * jax.lax.rsqrt(var + BN_EPS)
    shift = beta_ref[...] - mean * scale

    h = h_ref[...].astype(jnp.float32)
    hn = jnp.maximum(h * scale + shift, 0.0).astype(jnp.bfloat16)
    z = jnp.dot(hn, w_ref[...], preferred_element_type=jnp.float32)
    z_ref[...] = z

    col_sum = jnp.sum(z, axis=0, keepdims=True)
    col_sq = jnp.sum(z * z, axis=0, keepdims=True)
    stats2_ref[...] += jnp.concatenate([col_sum, col_sq], axis=0)


def _bn_final_kernel(z_ref, stats2_ref, o_ref, *, batch):
    """out = bn2(z) (affine=False), folded into per-column scale/shift."""
    s2 = stats2_ref[...]
    inv_b = jnp.float32(1.0 / batch)
    mean = s2[0:1, :] * inv_b
    var = s2[1:2, :] * inv_b - mean * mean
    scale = jax.lax.rsqrt(var + BN_EPS)
    shift = -mean * scale
    o_ref[...] = (z_ref[...] * scale + shift).astype(o_ref.dtype)


@functools.partial(jax.jit, static_argnames=("tile_b",))
def branch_forward(feats, w1, gamma1, beta1, w2, *, tile_b=128):
    """Branch.forward on encoder features: projector(feats)."""
    B = feats.shape[0]
    tile_b = min(tile_b, B)
    assert B % tile_b == 0, "batch must be a multiple of the batch tile"
    n_tiles = B // tile_b

    w1_bf = w1.astype(jnp.bfloat16)   # bf16 weights for the MXU
    w2_bf = w2.astype(jnp.bfloat16)
    g1 = gamma1.reshape(1, HIDDEN_DIM).astype(jnp.float32)
    b1 = beta1.reshape(1, HIDDEN_DIM).astype(jnp.float32)

    reduce_params = pltpu.CompilerParams(
        dimension_semantics=("arbitrary",), vmem_limit_bytes=_VMEM_LIMIT)
    parallel_params = pltpu.CompilerParams(
        dimension_semantics=("parallel",), vmem_limit_bytes=_VMEM_LIMIT)

    # Stage A: h = x @ w1, plus column stats of h (resident accumulator).
    h, stats1 = pl.pallas_call(
        _linear_stats_kernel,
        grid=(n_tiles,),
        in_specs=[
            pl.BlockSpec((tile_b, IN_DIM), lambda i: (i, 0)),
            pl.BlockSpec((IN_DIM, HIDDEN_DIM), lambda i: (0, 0)),
        ],
        out_specs=[
            pl.BlockSpec((tile_b, HIDDEN_DIM), lambda i: (i, 0)),
            pl.BlockSpec((2, HIDDEN_DIM), lambda i: (0, 0)),
        ],
        out_shape=(
            jax.ShapeDtypeStruct((B, HIDDEN_DIM), jnp.bfloat16),
            jax.ShapeDtypeStruct((2, HIDDEN_DIM), jnp.float32),
        ),
        compiler_params=reduce_params,
    )(feats, w1_bf)

    # Stage B: z = relu(bn1(h)) @ w2, plus column stats of z.
    z, stats2 = pl.pallas_call(
        functools.partial(_bn_relu_linear_stats_kernel, batch=B),
        grid=(n_tiles,),
        in_specs=[
            pl.BlockSpec((tile_b, HIDDEN_DIM), lambda i: (i, 0)),
            pl.BlockSpec((2, HIDDEN_DIM), lambda i: (0, 0)),
            pl.BlockSpec((1, HIDDEN_DIM), lambda i: (0, 0)),
            pl.BlockSpec((1, HIDDEN_DIM), lambda i: (0, 0)),
            pl.BlockSpec((HIDDEN_DIM, OUT_DIM), lambda i: (0, 0)),
        ],
        out_specs=[
            pl.BlockSpec((tile_b, OUT_DIM), lambda i: (i, 0)),
            pl.BlockSpec((2, OUT_DIM), lambda i: (0, 0)),
        ],
        out_shape=(
            jax.ShapeDtypeStruct((B, OUT_DIM), jnp.float32),
            jax.ShapeDtypeStruct((2, OUT_DIM), jnp.float32),
        ),
        compiler_params=reduce_params,
    )(h, stats1, g1, b1, w2_bf)

    # Stage C: out = bn2(z) (affine=False).
    out = pl.pallas_call(
        functools.partial(_bn_final_kernel, batch=B),
        grid=(n_tiles,),
        in_specs=[
            pl.BlockSpec((tile_b, OUT_DIM), lambda i: (i, 0)),
            pl.BlockSpec((2, OUT_DIM), lambda i: (0, 0)),
        ],
        out_specs=pl.BlockSpec((tile_b, OUT_DIM), lambda i: (i, 0)),
        out_shape=jax.ShapeDtypeStruct((B, OUT_DIM), jnp.float32),
        compiler_params=parallel_params,
    )(z, stats2)
    return out


def branch_forward_ref(feats, w1, gamma1, beta1, w2):
    """Pure-JAX f32 reference of the same forward (PyTorch semantics)."""
    h = feats.astype(jnp.float32) @ w1
    m1 = h.mean(axis=0, keepdims=True)
    v1 = ((h - m1) ** 2).mean(axis=0, keepdims=True)
    h = (h - m1) / jnp.sqrt(v1 + BN_EPS) * gamma1 + beta1
    h = jnp.maximum(h, 0.0)
    z = h @ w2
    m2 = z.mean(axis=0, keepdims=True)
    v2 = ((z - m2) ** 2).mean(axis=0, keepdims=True)
    return (z - m2) / jnp.sqrt(v2 + BN_EPS)


def init_params(key):
    """Deterministic parameter init (PyTorch-style shapes)."""
    k1, k2, k3, k4 = jax.random.split(key, 4)
    bound1 = 1.0 / jnp.sqrt(jnp.float32(IN_DIM))
    w1 = jax.random.uniform(k1, (IN_DIM, HIDDEN_DIM), jnp.float32, -bound1, bound1)
    bound2 = 1.0 / jnp.sqrt(jnp.float32(HIDDEN_DIM))
    w2 = jax.random.uniform(k2, (HIDDEN_DIM, OUT_DIM), jnp.float32, -bound2, bound2)
    # BatchNorm1d defaults are gamma=1, beta=0; randomize mildly so the affine
    # path is actually exercised by the verification below.
    gamma1 = jax.random.uniform(k3, (HIDDEN_DIM,), jnp.float32, 0.5, 1.5)
    beta1 = 0.1 * jax.random.normal(k4, (HIDDEN_DIM,), jnp.float32)
    return w1, gamma1, beta1, w2


if __name__ == "__main__":
    key = jax.random.PRNGKey(0)
    k_feat, k_param = jax.random.split(key)

    batch = 512   # 4 batch tiles of 128 rows -> exercises the grid/pipelining
    feats = jax.random.normal(k_feat, (batch, IN_DIM), jnp.float32)  # encoder output
    w1, gamma1, beta1, w2 = init_params(k_param)

    out = branch_forward(feats, w1, gamma1, beta1, w2, tile_b=128)
    out = jax.block_until_ready(out)

    ref = branch_forward_ref(feats, w1, gamma1, beta1, w2)
    assert out.shape == (batch, OUT_DIM)
    # bf16 MXU matmuls + bf16-stored h vs f32 reference: outputs are
    # BN-normalized (O(1)), so a bf16-scale absolute tolerance is appropriate.
    max_err = float(jnp.max(jnp.abs(out - ref)))
    assert max_err < 5e-2, f"mismatch vs reference: max_abs_err={max_err}"

    print("KERNEL_OK")
</pallas_src>

<mosaic_0001>
module attributes {stable_mosaic.version = 11 : i64} {
  func.func @_bn_relu_linear_stats_kernel(%arg0: i32, %arg1: memref<128x256xbf16, #tpu.memory_space<vmem>>, %arg2: memref<2x256xf32, #tpu.memory_space<vmem>>, %arg3: memref<1x256xf32, #tpu.memory_space<vmem>>, %arg4: memref<1x256xf32, #tpu.memory_space<vmem>>, %arg5: memref<256x128xbf16, #tpu.memory_space<vmem>>, %arg6: memref<128x128xf32, #tpu.memory_space<vmem>>, %arg7: memref<2x128xf32, #tpu.memory_space<vmem>>) attributes {dimension_semantics = [#tpu.dimension_semantics<arbitrary>], iteration_bounds = array<i64: 4>, scalar_prefetch = 0 : i64, scratch_operands = 0 : i64, tpu.core_type = #tpu.core_type<tc>, window_params = [{transform_indices = @transform_0, window_bounds = array<i64: 128, 256>}, {pipeline_mode = #tpu.pipeline_mode<synchronous>, transform_indices = @transform_1, window_bounds = array<i64: 2, 256>}, {pipeline_mode = #tpu.pipeline_mode<synchronous>, transform_indices = @transform_2, window_bounds = array<i64: 1, 256>}, {pipeline_mode = #tpu.pipeline_mode<synchronous>, transform_indices = @transform_3, window_bounds = array<i64: 1, 256>}, {pipeline_mode = #tpu.pipeline_mode<synchronous>, transform_indices = @transform_4, window_bounds = array<i64: 256, 128>}, {transform_indices = @transform_5, window_bounds = array<i64: 128, 128>}, {pipeline_mode = #tpu.pipeline_mode<synchronous>, transform_indices = @transform_6, window_bounds = array<i64: 2, 128>}]} {
    %c0_i32 = arith.constant 0 : i32
    %0 = arith.cmpi eq, %arg0, %c0_i32 : i32
    %1 = arith.extui %0 : i1 to i32
    %c0_i32_0 = arith.constant 0 : i32
    %2 = arith.cmpi ne, %1, %c0_i32_0 : i32
    scf.if %2 {
      %cst_22 = arith.constant 0.000000e+00 : f32
      %41 = vector.broadcast %cst_22 : f32 to vector<2x128xf32>
      %c0_23 = arith.constant 0 : index
      %c0_24 = arith.constant 0 : index
      %42 = vector.load %arg7[%c0_23, %c0_24] : memref<2x128xf32, #tpu.memory_space<vmem>>, vector<2x128xf32>
      tpu.vector_store %arg7[%c0_23, %c0_24], %41 {strides = array<i32>} : memref<2x128xf32, #tpu.memory_space<vmem>>, vector<2x128xf32>,
    } else {
    }
    %c0 = arith.constant 0 : index
    %c0_1 = arith.constant 0 : index
    %3 = vector.load %arg2[%c0, %c0_1] : memref<2x256xf32, #tpu.memory_space<vmem>>, vector<2x256xf32>
    %4 = vector.extract_strided_slice %3 {offsets = [0, 0], sizes = [1, 256], strides = [1, 1]} : vector<2x256xf32> to vector<1x256xf32>
    %cst = arith.constant 0.001953125 : f32
    %5 = vector.broadcast %cst : f32 to vector<1x256xf32>
    %6 = arith.mulf %4, %5 : vector<1x256xf32>
    %7 = vector.extract_strided_slice %3 {offsets = [1, 0], sizes = [1, 256], strides = [1, 1]} : vector<2x256xf32> to vector<1x256xf32>
    %cst_2 = arith.constant 0.001953125 : f32
    %8 = vector.broadcast %cst_2 : f32 to vector<1x256xf32>
    %9 = arith.mulf %7, %8 : vector<1x256xf32>
    %10 = arith.mulf %6, %6 : vector<1x256xf32>
    %11 = arith.subf %9, %10 : vector<1x256xf32>
    %c0_3 = arith.constant 0 : index
    %c0_4 = arith.constant 0 : index
    %12 = vector.load %arg3[%c0_3, %c0_4] : memref<1x256xf32, #tpu.memory_space<vmem>>, vector<1x256xf32>
    %cst_5 = arith.constant 9.99999974E-6 : f32
    %13 = vector.broadcast %cst_5 : f32 to vector<1x256xf32>
    %14 = arith.addf %11, %13 : vector<1x256xf32>
    %15 = math.rsqrt %14 : vector<1x256xf32>
    %16 = arith.mulf %12, %15 : vector<1x256xf32>
    %c0_6 = arith.constant 0 : index
    %c0_7 = arith.constant 0 : index
    %17 = vector.load %arg4[%c0_6, %c0_7] : memref<1x256xf32, #tpu.memory_space<vmem>>, vector<1x256xf32>
    %18 = arith.mulf %6, %16 : vector<1x256xf32>
    %19 = arith.subf %17, %18 : vector<1x256xf32>
    %c0_8 = arith.constant 0 : index
    %c0_9 = arith.constant 0 : index
    %20 = vector.load %arg1[%c0_8, %c0_9] : memref<128x256xbf16, #tpu.memory_space<vmem>>, vector<128x256xbf16>
    %21 = arith.extf %20 : vector<128x256xbf16> to vector<128x256xf32>
    %22 = vector.broadcast %16 : vector<1x256xf32> to vector<128x256xf32>
    %23 = arith.mulf %21, %22 : vector<128x256xf32>
    %24 = vector.broadcast %19 : vector<1x256xf32> to vector<128x256xf32>
    %25 = arith.addf %23, %24 : vector<128x256xf32>
    %cst_10 = arith.constant 0.000000e+00 : f32
    %26 = vector.broadcast %cst_10 : f32 to vector<128x256xf32>
    %27 = arith.maximumf %25, %26 : vector<128x256xf32>
    %28 = arith.truncf %27 : vector<128x256xf32> to vector<128x256xbf16>
    %c0_11 = arith.constant 0 : index
    %c0_12 = arith.constant 0 : index
    %29 = vector.load %arg5[%c0_11, %c0_12] : memref<256x128xbf16, #tpu.memory_space<vmem>>, vector<256x128xbf16>
    %cst_13 = arith.constant dense<0.000000e+00> : vector<128x128xf32>
    %30 = tpu.matmul %28, %29, %cst_13 {dimension_numbers = #tpu.dot_dimension_numbers<[1], [0], [0], [1], [0, 0, 1, 1], [], []>} : vector<128x256xbf16>, vector<256x128xbf16>, vector<128x128xf32> -> vector<128x128xf32>
    %c0_14 = arith.constant 0 : index
    %c0_15 = arith.constant 0 : index
    %31 = vector.load %arg6[%c0_14, %c0_15] : memref<128x128xf32, #tpu.memory_space<vmem>>, vector<128x128xf32>
    tpu.vector_store %arg6[%c0_14, %c0_15], %30 {strides = array<i32>} : memref<128x128xf32, #tpu.memory_space<vmem>>, vector<128x128xf32>,
    %cst_16 = arith.constant dense<0.000000e+00> : vector<128xf32>
    %32 = vector.multi_reduction <add>, %30, %cst_16 [0] : vector<128x128xf32> to vector<128xf32>
    %33 = vector.shape_cast %32 : vector<128xf32> to vector<1x128xf32>
    %34 = arith.mulf %30, %30 : vector<128x128xf32>
    %cst_17 = arith.constant dense<0.000000e+00> : vector<128xf32>
    %35 = vector.multi_reduction <add>, %34, %cst_17 [0] : vector<128x128xf32> to vector<128xf32>
    %36 = vector.shape_cast %35 : vector<128xf32> to vector<1x128xf32>
    %c0_18 = arith.constant 0 : index
    %c0_19 = arith.constant 0 : index
    %37 = vector.load %arg7[%c0_18, %c0_19] : memref<2x128xf32, #tpu.memory_space<vmem>>, vector<2x128xf32>
    %38 = tpu.concatenate %33, %36 in 0 : vector<1x128xf32>, vector<1x128xf32> -> vector<2x128xf32>
    %39 = arith.addf %37, %38 : vector<2x128xf32>
    %c0_20 = arith.constant 0 : index
    %c0_21 = arith.constant 0 : index
    %40 = vector.load %arg7[%c0_20, %c0_21] : memref<2x128xf32, #tpu.memory_space<vmem>>, vector<2x128xf32>
    tpu.vector_store %arg7[%c0_20, %c0_21], %39 {strides = array<i32>} : memref<2x128xf32, #tpu.memory_space<vmem>>, vector<2x128xf32>,
    return
  }
  func.func @transform_0(%arg0: i32) -> (i32, i32) {
    %c0_i32 = arith.constant 0 : i32
    %c0_i32_0 = arith.constant 0 : i32
    return %arg0, %c0_i32 : i32, i32
  }
  func.func @transform_1(%arg0: i32) -> (i32, i32) {
    %c0_i32 = arith.constant 0 : i32
    %c0_i32_0 = arith.constant 0 : i32
    %c0_i32_1 = arith.constant 0 : i32
    return %c0_i32, %c0_i32_0 : i32, i32
  }
  func.func @transform_2(%arg0: i32) -> (i32, i32) {
    %c0_i32 = arith.constant 0 : i32
    %c0_i32_0 = arith.constant 0 : i32
    %c0_i32_1 = arith.constant 0 : i32
    return %c0_i32, %c0_i32_0 : i32, i32
  }
  func.func @transform_3(%arg0: i32) -> (i32, i32) {
    %c0_i32 = arith.constant 0 : i32
    %c0_i32_0 = arith.constant 0 : i32
    %c0_i32_1 = arith.constant 0 : i32
    return %c0_i32, %c0_i32_0 : i32, i32
  }
  func.func @transform_4(%arg0: i32) -> (i32, i32) {
    %c0_i32 = arith.constant 0 : i32
    %c0_i32_0 = arith.constant 0 : i32
    %c0_i32_1 = arith.constant 0 : i32
    return %c0_i32, %c0_i32_0 : i32, i32
  }
  func.func @transform_5(%arg0: i32) -> (i32, i32) {
    %c0_i32 = arith.constant 0 : i32
    %c0_i32_0 = arith.constant 0 : i32
    return %arg0, %c0_i32 : i32, i32
  }
  func.func @transform_6(%arg0: i32) -> (i32, i32) {
    %c0_i32 = arith.constant 0 : i32
    %c0_i32_0 = arith.constant 0 : i32
    %c0_i32_1 = arith.constant 0 : i32
    return %c0_i32, %c0_i32_0 : i32, i32
  }
}

module attributes {stable_mosaic.version = 11 : i64} {
  func.func @_linear_stats_kernel(%arg0: i32, %arg1: memref<128x512xf32, #tpu.memory_space<vmem>>, %arg2: memref<512x256xbf16, #tpu.memory_space<vmem>>, %arg3: memref<128x256xbf16, #tpu.memory_space<vmem>>, %arg4: memref<2x256xf32, #tpu.memory_space<vmem>>) attributes {dimension_semantics = [#tpu.dimension_semantics<arbitrary>], iteration_bounds = array<i64: 4>, scalar_prefetch = 0 : i64, scratch_operands = 0 : i64, tpu.core_type = #tpu.core_type<tc>, window_params = [{transform_indices = @transform_0, window_bounds = array<i64: 128, 512>}, {pipeline_mode = #tpu.pipeline_mode<synchronous>, transform_indices = @transform_1, window_bounds = array<i64: 512, 256>}, {transform_indices = @transform_2, window_bounds = array<i64: 128, 256>}, {pipeline_mode = #tpu.pipeline_mode<synchronous>, transform_indices = @transform_3, window_bounds = array<i64: 2, 256>}]} {
    %c0_i32 = arith.constant 0 : i32
    %0 = arith.cmpi eq, %arg0, %c0_i32 : i32
    %1 = arith.extui %0 : i1 to i32
    %c0_i32_0 = arith.constant 0 : i32
    %2 = arith.cmpi ne, %1, %c0_i32_0 : i32
    scf.if %2 {
      %cst_12 = arith.constant 0.000000e+00 : f32
      %18 = vector.broadcast %cst_12 : f32 to vector<2x256xf32>
      %c0_13 = arith.constant 0 : index
      %c0_14 = arith.constant 0 : index
      %19 = vector.load %arg4[%c0_13, %c0_14] : memref<2x256xf32, #tpu.memory_space<vmem>>, vector<2x256xf32>
      tpu.vector_store %arg4[%c0_13, %c0_14], %18 {strides = array<i32>} : memref<2x256xf32, #tpu.memory_space<vmem>>, vector<2x256xf32>,
    } else {
    }
    %c0 = arith.constant 0 : index
    %c0_1 = arith.constant 0 : index
    %3 = vector.load %arg1[%c0, %c0_1] : memref<128x512xf32, #tpu.memory_space<vmem>>, vector<128x512xf32>
    %4 = arith.truncf %3 : vector<128x512xf32> to vector<128x512xbf16>
    %c0_2 = arith.constant 0 : index
    %c0_3 = arith.constant 0 : index
    %5 = vector.load %arg2[%c0_2, %c0_3] : memref<512x256xbf16, #tpu.memory_space<vmem>>, vector<512x256xbf16>
    %cst = arith.constant dense<0.000000e+00> : vector<128x256xf32>
    %6 = tpu.matmul %4, %5, %cst {dimension_numbers = #tpu.dot_dimension_numbers<[1], [0], [0], [1], [0, 0, 1, 1], [], []>} : vector<128x512xbf16>, vector<512x256xbf16>, vector<128x256xf32> -> vector<128x256xf32>
    %7 = arith.truncf %6 : vector<128x256xf32> to vector<128x256xbf16>
    %c0_4 = arith.constant 0 : index
    %c0_5 = arith.constant 0 : index
    %8 = vector.load %arg3[%c0_4, %c0_5] : memref<128x256xbf16, #tpu.memory_space<vmem>>, vector<128x256xbf16>
    tpu.vector_store %arg3[%c0_4, %c0_5], %7 {strides = array<i32>} : memref<128x256xbf16, #tpu.memory_space<vmem>>, vector<128x256xbf16>,
    %cst_6 = arith.constant dense<0.000000e+00> : vector<256xf32>
    %9 = vector.multi_reduction <add>, %6, %cst_6 [0] : vector<128x256xf32> to vector<256xf32>
    %10 = vector.shape_cast %9 : vector<256xf32> to vector<1x256xf32>
    %11 = arith.mulf %6, %6 : vector<128x256xf32>
    %cst_7 = arith.constant dense<0.000000e+00> : vector<256xf32>
    %12 = vector.multi_reduction <add>, %11, %cst_7 [0] : vector<128x256xf32> to vector<256xf32>
    %13 = vector.shape_cast %12 : vector<256xf32> to vector<1x256xf32>
    %c0_8 = arith.constant 0 : index
    %c0_9 = arith.constant 0 : index
    %14 = vector.load %arg4[%c0_8, %c0_9] : memref<2x256xf32, #tpu.memory_space<vmem>>, vector<2x256xf32>
    %15 = tpu.concatenate %10, %13 in 0 : vector<1x256xf32>, vector<1x256xf32> -> vector<2x256xf32>
    %16 = arith.addf %14, %15 : vector<2x256xf32>
    %c0_10 = arith.constant 0 : index
    %c0_11 = arith.constant 0 : index
    %17 = vector.load %arg4[%c0_10, %c0_11] : memref<2x256xf32, #tpu.memory_space<vmem>>, vector<2x256xf32>
    tpu.vector_store %arg4[%c0_10, %c0_11], %16 {strides = array<i32>} : memref<2x256xf32, #tpu.memory_space<vmem>>, vector<2x256xf32>,
    return
  }
  func.func @transform_0(%arg0: i32) -> (i32, i32) {
    %c0_i32 = arith.constant 0 : i32
    %c0_i32_0 = arith.constant 0 : i32
    return %arg0, %c0_i32 : i32, i32
  }
  func.func @transform_1(%arg0: i32) -> (i32, i32) {
    %c0_i32 = arith.constant 0 : i32
    %c0_i32_0 = arith.constant 0 : i32
    %c0_i32_1 = arith.constant 0 : i32
    return %c0_i32, %c0_i32_0 : i32, i32
  }
  func.func @transform_2(%arg0: i32) -> (i32, i32) {
    %c0_i32 = arith.constant 0 : i32
    %c0_i32_0 = arith.constant 0 : i32
    return %arg0, %c0_i32 : i32, i32
  }
  func.func @transform_3(%arg0: i32) -> (i32, i32) {
    %c0_i32 = arith.constant 0 : i32
    %c0_i32_0 = arith.constant 0 : i32
    %c0_i32_1 = arith.constant 0 : i32
    return %c0_i32, %c0_i32_0 : i32, i32
  }
}

module attributes {stable_mosaic.version = 11 : i64} {
  func.func @_bn_final_kernel(%arg0: i32, %arg1: memref<128x128xf32, #tpu.memory_space<vmem>>, %arg2: memref<2x128xf32, #tpu.memory_space<vmem>>, %arg3: memref<128x128xf32, #tpu.memory_space<vmem>>) attributes {dimension_semantics = [#tpu.dimension_semantics<parallel>], iteration_bounds = array<i64: 4>, scalar_prefetch = 0 : i64, scratch_operands = 0 : i64, tpu.core_type = #tpu.core_type<tc>, window_params = [{transform_indices = @transform_0, window_bounds = array<i64: 128, 128>}, {pipeline_mode = #tpu.pipeline_mode<synchronous>, transform_indices = @transform_1, window_bounds = array<i64: 2, 128>}, {transform_indices = @transform_2, window_bounds = array<i64: 128, 128>}]} {
    %c0 = arith.constant 0 : index
    %c0_0 = arith.constant 0 : index
    %0 = vector.load %arg2[%c0, %c0_0] : memref<2x128xf32, #tpu.memory_space<vmem>>, vector<2x128xf32>
    %1 = vector.extract_strided_slice %0 {offsets = [0, 0], sizes = [1, 128], strides = [1, 1]} : vector<2x128xf32> to vector<1x128xf32>
    %cst = arith.constant 0.001953125 : f32
    %2 = vector.broadcast %cst : f32 to vector<1x128xf32>
    %3 = arith.mulf %1, %2 : vector<1x128xf32>
    %4 = vector.extract_strided_slice %0 {offsets = [1, 0], sizes = [1, 128], strides = [1, 1]} : vector<2x128xf32> to vector<1x128xf32>
    %cst_1 = arith.constant 0.001953125 : f32
    %5 = vector.broadcast %cst_1 : f32 to vector<1x128xf32>
    %6 = arith.mulf %4, %5 : vector<1x128xf32>
    %7 = arith.mulf %3, %3 : vector<1x128xf32>
    %8 = arith.subf %6, %7 : vector<1x128xf32>
    %cst_2 = arith.constant 9.99999974E-6 : f32
    %9 = vector.broadcast %cst_2 : f32 to vector<1x128xf32>
    %10 = arith.addf %8, %9 : vector<1x128xf32>
    %11 = math.rsqrt %10 : vector<1x128xf32>
    %cst_3 = arith.constant 0.000000e+00 : f32
    %12 = vector.broadcast %cst_3 : f32 to vector<1x128xf32>
    %13 = arith.subf %12, %3 : vector<1x128xf32>
    %14 = arith.mulf %13, %11 : vector<1x128xf32>
    %c0_4 = arith.constant 0 : index
    %c0_5 = arith.constant 0 : index
    %15 = vector.load %arg1[%c0_4, %c0_5] : memref<128x128xf32, #tpu.memory_space<vmem>>, vector<128x128xf32>
    %16 = vector.broadcast %11 : vector<1x128xf32> to vector<128x128xf32>
    %17 = arith.mulf %15, %16 : vector<128x128xf32>
    %18 = vector.broadcast %14 : vector<1x128xf32> to vector<128x128xf32>
    %19 = arith.addf %17, %18 : vector<128x128xf32>
    %c0_6 = arith.constant 0 : index
    %c0_7 = arith.constant 0 : index
    %20 = vector.load %arg3[%c0_6, %c0_7] : memref<128x128xf32, #tpu.memory_space<vmem>>, vector<128x128xf32>
    tpu.vector_store %arg3[%c0_6, %c0_7], %19 {strides = array<i32>} : memref<128x128xf32, #tpu.memory_space<vmem>>, vector<128x128xf32>,
    return
  }
  func.func @transform_0(%arg0: i32) -> (i32, i32) {
    %c0_i32 = arith.constant 0 : i32
    %c0_i32_0 = arith.constant 0 : i32
    return %arg0, %c0_i32 : i32, i32
  }
  func.func @transform_1(%arg0: i32) -> (i32, i32) {
    %c0_i32 = arith.constant 0 : i32
    %c0_i32_0 = arith.constant 0 : i32
    %c0_i32_1 = arith.constant 0 : i32
    return %c0_i32, %c0_i32_0 : i32, i32
  }
  func.func @transform_2(%arg0: i32) -> (i32, i32) {
    %c0_i32 = arith.constant 0 : i32
    %c0_i32_0 = arith.constant 0 : i32
    return %arg0, %c0_i32 : i32, i32
  }
}

</mosaic_0001>

<llo_original>
// kernel: branch_forward.5
$region0: #{branch_forward.5}
  #allocation0 [shape = 'u32[]', space=smem, size = 0x4, offset = 0x4, fixed_abs, tag = 'smem constant byte address 0x4 - core index']
  #allocation1 [shape = 'u32[144,128]{1,0:T(1,128)}', space=vmem, size = 0x12000, scoped, tag = 'internal scratch']
  %s0 = inlined_call_operand.vmem [shape: f32[512,128], index: 0, kind: input, shape index: {}]
  %s1 = inlined_call_operand.vmem [shape: f32[2,128], index: 1, kind: input, shape index: {}]
  %s2 = inlined_call_operand.hbm [shape: f32[512,128], index: 2, kind: output, shape index: {}]
  %s3 = sld [smem:[#allocation0]]
  $region41: #{branch_forward.5} parent=0
    _
  %s5 = ssub.s32 1, %s3
  %s6 = scalar_select 0, %s5, %s3
  $region1: #{branch_forward.5} parent=0
    #allocation2 [shape = 'u8[131072]{0}', space=vmem, size = 0x20000, scoped, tag = 'output window, operand 0']
    #allocation3 [shape = 's32[2]{0}', space=sflag, size = 0x8, scoped, tag = 'scoped memory for branch_forward.5']
    %7 = vsyncpa [#allocation3], 0
    %s8 = scalar_lea.sflag [#allocation3], 1
    %9 = vsyncpa %s8, 0
    loop: start=0, step=1, limit=6
    $region2: #{branch_forward.5} parent=1 // loop_pre_header
      _
    $region3: #{branch_forward.5} parent=1 // loop_header
      %s11 = sphi 0, %s15
      %p12 = scmp.ge.s32.totalorder %s11, 6
      %s21 = sphi 0, %s23
      %s24 = sphi 0, %s21
      %s25 = sphi 0, %s24
      %s41 = sphi 0, %s25
      %s45 = sphi 0, %s45
      %s47 = sphi 0, %s45
      %s48 = sphi 0, %s47
      %s62 = sphi 0, %s48
      %s68 = sphi 0, %s70
      %s71 = sphi 0, %s68
      %s72 = sphi 0, %s71
      %s88 = sphi 0, %s72
    $region4: #{branch_forward.5} parent=1 // loop_header_branch
      %14 = sbr.rel (%p12) target = $region8
    $region5: #{branch_forward.5} parent=1 // loop_body
      %s16 = ssub.s32 %s11, 1
      %s17 = ssub.s32 %s11, 2
      %s18 = sadd.s32 %s11, 1
      %s19 = ssub.s32 %s11, %s18
      %p20 = scmp.eq.s32.totalorder %s19, 0
      %s22 = sadd.s32 %s21, 1
      %s23 = scalar_select %p20, %s21, %s22
      %p26 = pneg %p20
      %p27 = scmp.eq.s32.totalorder %s11, 3
      %p28 = por %p26, %p27
      %p29 = scmp.ne.s32.totalorder %s21, %s24
      %p30 = scmp.eq.s32.totalorder %s11, 0
      %p31 = por %p29, %p30
      %p32 = scmp.ne.s32.totalorder %s21, %s24
      %p33 = scmp.eq.s32.totalorder %s16, 3
      %p34 = por %p32, %p33
      %p35 = scmp.ne.s32.totalorder %s24, %s25
      %p36 = scmp.eq.s32.totalorder %s16, 0
      %p37 = por %p35, %p36
      %p38 = scmp.ne.s32.totalorder %s24, %s25
      %p39 = scmp.eq.s32.totalorder %s17, 3
      %p40 = por %p38, %p39
      %p42 = scmp.ne.s32.totalorder %s25, %s41
      %p43 = scmp.eq.s32.totalorder %s17, 0
      %p44 = por %p42, %p43
      %s46 = sadd.s32 %s45, 1
      %p49 = scmp.eq.s32.totalorder %s11, 3
      %p50 = scmp.ne.s32.totalorder %s45, %s47
      %p51 = scmp.eq.s32.totalorder %s11, 0
      %p52 = por %p50, %p51
      %p53 = scmp.ne.s32.totalorder %s45, %s47
      %p54 = scmp.eq.s32.totalorder %s16, 3
      %p55 = por %p53, %p54
      %p56 = scmp.ne.s32.totalorder %s47, %s48
      %p57 = scmp.eq.s32.totalorder %s16, 0
      %p58 = por %p56, %p57
      %p59 = scmp.ne.s32.totalorder %s47, %s48
      %p60 = scmp.eq.s32.totalorder %s17, 3
      %p61 = por %p59, %p60
      %p63 = scmp.ne.s32.totalorder %s48, %s62
      %p64 = scmp.eq.s32.totalorder %s17, 0
      %p65 = por %p63, %p64
      %s66 = ssub.s32 %s11, %s18
      %p67 = scmp.eq.s32.totalorder %s66, 0
      %s69 = sadd.s32 %s68, 1
      %s70 = scalar_select %p67, %s68, %s69
      %p73 = pneg %p67
      %p74 = scmp.eq.s32.totalorder %s11, 3
      %p75 = por %p73, %p74
      %p76 = scmp.ne.s32.totalorder %s68, %s71
      %p77 = scmp.eq.s32.totalorder %s11, 0
      %p78 = por %p76, %p77
      %p79 = scmp.ne.s32.totalorder %s68, %s71
      %p80 = scmp.eq.s32.totalorder %s16, 3
      %p81 = por %p79, %p80
      %p82 = scmp.ne.s32.totalorder %s71, %s72
      %p83 = scmp.eq.s32.totalorder %s16, 0
      %p84 = por %p82, %p83
      %p85 = scmp.ne.s32.totalorder %s71, %s72
      %p86 = scmp.eq.s32.totalorder %s17, 3
      %p87 = por %p85, %p86
      %p89 = scmp.ne.s32.totalorder %s72, %s88
      %p90 = scmp.eq.s32.totalorder %s17, 0
      %p91 = por %p89, %p90
      %p92 = scmp.le.s32.totalorder 1, %s11
      %p93 = scmp.lt.s32.totalorder %s11, 5
      %p94 = pnand %p92, %p93
      %p95 = pneg %p94
      // Predicated region
      $region9: #{branch_forward.5} parent=5 // pred_check
        _
      $region10: #{branch_forward.5} parent=5 // pred_check_branch
        %97 = sbr.rel (%p94) target = $region12
      $region11: #{branch_forward.5} parent=5 // pred_region
        %s98 = ssub.s32 %s11, 1
        // Predicated region
        $region13: #{branch_forward.5} parent=11 // pred_check
          %p99 = pneg %p58
        $region14: #{branch_forward.5} parent=11 // pred_check_branch
          %101 = sbr.rel (%p99) target = $region16
        $region15: #{branch_forward.5} parent=11 // pred_region
          _
        $region16: #{branch_forward.5} parent=11 // pred_fallthru
          _
      $region12: #{branch_forward.5} parent=5 // pred_fallthru
        _
      %p102 = scmp.lt.s32.totalorder %s11, 4
      // Predicated region
      $region17: #{branch_forward.5} parent=5 // pred_check
        %p103 = pneg %p102
      $region18: #{branch_forward.5} parent=5 // pred_check_branch
        %105 = sbr.rel (%p103) target = $region20
      $region19: #{branch_forward.5} parent=5 // pred_region
        // Predicated region
        $region21: #{branch_forward.5} parent=19 // pred_check
          %p106 = pneg %p31
        $region22: #{branch_forward.5} parent=19 // pred_check_branch
          %108 = sbr.rel (%p106) target = $region24
        $region23: #{branch_forward.5} parent=19 // pred_region
          %s109 = smul.u32 16, %s11
          %p110 = scmp.lt.s32.totalorder %s109, 63
          %s111 = scalar_select %p110, %s109, 63
          %s112 = smul.addr %s111, 8
          %s113 = scalar_lea.vmem %s0, %s112
          %s114 = smul.u32 16, %s11
        $region24: #{branch_forward.5} parent=19 // pred_fallthru
          _
      $region20: #{branch_forward.5} parent=5 // pred_fallthru
        _
      %p115 = scmp.le.s32.totalorder 1, %s11
      %p116 = scmp.lt.s32.totalorder %s11, 5
      %p117 = pnand %p115, %p116
      %p118 = pneg %p117
      // Predicated region
      $region25: #{branch_forward.5} parent=5 // pred_check
        _
      $region26: #{branch_forward.5} parent=5 // pred_check_branch
        %120 = sbr.rel (%p117) target = $region28
      $region27: #{branch_forward.5} parent=5 // pred_region
        %s121 = ssub.s32 %s11, 1
        %s122 = smul.u32 16, %s16
        %p123 = scmp.lt.s32.totalorder %s122, 63
        %s124 = scalar_select %p123, %s122, 63
        %s125 = smul.addr %s124, 8
        %s126 = scalar_lea.vmem %s0, %s125
        %p127 = pneg %p37
        %p128 = pneg %p34
        %p129 = pneg %p58
        %p130 = pneg %p55
        %p131 = pneg %p84
        %p132 = pneg %p81
        %s133 = sand.u32 %s71, 1
        %s134 = scalar_lea.sflag [#allocation3], %s133
        %s135 = sand.u32 %s71, 1
        %s136 = smul.addr %s135, 128
        %s137 = scalar_lea.vmem [#allocation2], %s136
        %s138 = smul.u32 16, %s16
        %p139 = scmp.lt.s32.totalorder %s138, 63
        %s140 = scalar_select %p139, %s138, 63
        %s141 = smul.addr %s140, 8
        %s142 = scalar_lea.vmem %s0, %s141
        %s143 = smul.u32 16, %s16
        %s144 = smul.u32 16, %s16
        %v145 = vld [vmem:[%s1] sm:$0x3]
        %v146 = vmul.f32 %v145, 0.001953125
        %v147 = vmul.f32 %v146, %v146
        %v149 = vrot.slane %v147, 7
        %v151 = vsub.f32 %v146, %v149
        %v152 = vadd.f32 %v151, 1e-05
        %v153 = vrsqrt.pop %v152
        %v154 = vsub.f32 0.0, %v146
        %v156 = vrot.slane %v153, 1
        %v158 = vmul.f32 %v154, %v156
        %v159 = vld [vmem:[%s142] sm:$0xff]
        %v160 = vld [vmem:[%s142 + $0x8] sm:$0xff]
        %v161 = vld [vmem:[%s142 + $0x10] sm:$0xff]
        %v162 = vld [vmem:[%s142 + $0x18] sm:$0xff]
        %v163 = vld [vmem:[%s142 + $0x20] sm:$0xff]
        %v164 = vld [vmem:[%s142 + $0x28] sm:$0xff]
        %v165 = vld [vmem:[%s142 + $0x30] sm:$0xff]
        %v166 = vld [vmem:[%s142 + $0x38] sm:$0xff]
        %v167 = vld [vmem:[%s142 + $0x40] sm:$0xff]
        %v168 = vld [vmem:[%s142 + $0x48] sm:$0xff]
        %v169 = vld [vmem:[%s142 + $0x50] sm:$0xff]
        %v170 = vld [vmem:[%s142 + $0x58] sm:$0xff]
        %v171 = vld [vmem:[%s142 + $0x60] sm:$0xff]
        %v172 = vld [vmem:[%s142 + $0x68] sm:$0xff]
        %v173 = vld [vmem:[%s142 + $0x70] sm:$0xff]
        %v174 = vld [vmem:[%s142 + $0x78] sm:$0xff]
        %v175 = vlaneseq
        %v176 = vshrl.u32 %v175, 7
        %v177 = vsub.s32 1, %v176
        %v178 = vrot.slane %v153, %v177
        %v179 = vmul.f32 %v159, %v178
        %v180 = vmul.f32 %v160, %v178
        %v181 = vmul.f32 %v161, %v178
        %v182 = vmul.f32 %v162, %v178
        %v183 = vmul.f32 %v163, %v178
        %v184 = vmul.f32 %v164, %v178
        %v185 = vmul.f32 %v165, %v178
        %v186 = vmul.f32 %v166, %v178
        %v187 = vmul.f32 %v167, %v178
        %v188 = vmul.f32 %v168, %v178
        %v189 = vmul.f32 %v169, %v178
        %v190 = vmul.f32 %v170, %v178
        %v191 = vmul.f32 %v171, %v178
        %v192 = vmul.f32 %v172, %v178
        %v193 = vmul.f32 %v173, %v178
        %v194 = vmul.f32 %v174, %v178
        %v195 = vlaneseq
        %v196 = vshrl.u32 %v195, 7
        %v197 = vsub.s32 0, %v196
        %v198 = vrot.slane %v158, %v197
        %v199 = vadd.f32 %v179, %v198
        %v200 = vadd.f32 %v180, %v198
        %v201 = vadd.f32 %v181, %v198
        %v202 = vadd.f32 %v182, %v198
        %v203 = vadd.f32 %v183, %v198
        %v204 = vadd.f32 %v184, %v198
        %v205 = vadd.f32 %v185, %v198
        %v206 = vadd.f32 %v186, %v198
        %v207 = vadd.f32 %v187, %v198
        %v208 = vadd.f32 %v188, %v198
        %v209 = vadd.f32 %v189, %v198
        %v210 = vadd.f32 %v190, %v198
        %v211 = vadd.f32 %v191, %v198
        %v212 = vadd.f32 %v192, %v198
        %v213 = vadd.f32 %v193, %v198
        %v214 = vadd.f32 %v194, %v198
        %215 = vst [vmem:[%s137] sm:$0xff] %v199
        %216 = vst [vmem:[%s137 + $0x8] sm:$0xff] %v200
        %217 = vst [vmem:[%s137 + $0x10] sm:$0xff] %v201
        %218 = vst [vmem:[%s137 + $0x18] sm:$0xff] %v202
        %219 = vst [vmem:[%s137 + $0x20] sm:$0xff] %v203
        %220 = vst [vmem:[%s137 + $0x28] sm:$0xff] %v204
        %221 = vst [vmem:[%s137 + $0x30] sm:$0xff] %v205
        %222 = vst [vmem:[%s137 + $0x38] sm:$0xff] %v206
        %223 = vst [vmem:[%s137 + $0x40] sm:$0xff] %v207
        %224 = vst [vmem:[%s137 + $0x48] sm:$0xff] %v208
        %225 = vst [vmem:[%s137 + $0x50] sm:$0xff] %v209
        %226 = vst [vmem:[%s137 + $0x58] sm:$0xff] %v210
        %227 = vst [vmem:[%s137 + $0x60] sm:$0xff] %v211
        %228 = vst [vmem:[%s137 + $0x68] sm:$0xff] %v212
        %229 = vst [vmem:[%s137 + $0x70] sm:$0xff] %v213
        %230 = vst [vmem:[%s137 + $0x78] sm:$0xff] %v214
        %s231 = sand.u32 %s71, 1
        %s232 = scalar_lea.sflag [#allocation3], %s231
        %s233 = sand.u32 %s71, 1
        %s234 = smul.addr %s233, 128
        %s235 = scalar_lea.vmem [#allocation2], %s234
        // Predicated region
        $region29: #{branch_forward.5} parent=27 // pred_check
          %p236 = pneg %p81
        $region30: #{branch_forward.5} parent=27 // pred_check_branch
          %238 = sbr.rel (%p236) target = $region32
        $region31: #{branch_forward.5} parent=27 // pred_region
          %s239 = smul.u32 16, %s16
          %s241 = ssub.s32 2048, 2048
          %242 = vsyncadd %s232, %s241
          %s243 = smul.addr %s239, 128
          %s244 = scalar_lea.hbm %s2, %s243
          %s245 = sshll.u32 %s235, 4
          %s246 = int_to_ptr.vmem [resolvable:$true] %s245
          %251 = dma.vmem_to_hbm [thread:$0]  %s246, 2048, %s244, %s232, 128, 128, 8
        $region32: #{branch_forward.5} parent=27 // pred_fallthru
          _
      $region28: #{branch_forward.5} parent=5 // pred_fallthru
        _
      %p252 = scmp.le.s32.totalorder 2, %s11
      // Predicated region
      $region33: #{branch_forward.5} parent=5 // pred_check
        %p253 = pneg %p252
      $region34: #{branch_forward.5} parent=5 // pred_check_branch
        %255 = sbr.rel (%p253) target = $region36
      $region35: #{branch_forward.5} parent=5 // pred_region
        %s256 = ssub.s32 %s11, 2
        // Predicated region
        $region37: #{branch_forward.5} parent=35 // pred_check
          %p257 = pneg %p87
        $region38: #{branch_forward.5} parent=35 // pred_check_branch
          %259 = sbr.rel (%p257) target = $region40
        $region39: #{branch_forward.5} parent=35 // pred_region
          %s260 = sand.u32 %s72, 1
          %s261 = scalar_lea.sflag [#allocation3], %s260
          %s262 = sand.u32 %s72, 1
          %s263 = smul.addr %s262, 128
          %s264 = scalar_lea.vmem [#allocation2], %s263
          %265 = dma.done %s261, 2048
        $region40: #{branch_forward.5} parent=35 // pred_fallthru
          _
      $region36: #{branch_forward.5} parent=5 // pred_fallthru
        _
    $region6: #{branch_forward.5} parent=1 // loop_footer
      %s15 = sadd.s32 1, %s11
    $region7: #{branch_forward.5} parent=1 // loop_footer_branch
      %10 = sbr.rel target = $region3
    $region8: #{branch_forward.5} parent=1 // loop_exit
      _
    %266 = vsyncpa [#allocation3], 1
    %s267 = scalar_lea.sflag [#allocation3], 1
    %268 = vsyncpa %s267, 1

// kernel: branch_forward.4
$region0: #{branch_forward.4}
  #allocation0 [shape = 'u32[]', space=smem, size = 0x4, offset = 0x4, fixed_abs, tag = 'smem constant byte address 0x4 - core index']
  #allocation1 [shape = 'u32[144,128]{1,0:T(1,128)}', space=vmem, size = 0x12000, scoped, tag = 'internal scratch']
  %s0 = inlined_call_operand.vmem [shape: bf16[512,256], index: 0, kind: input, shape index: {}]
  %s1 = inlined_call_operand.vmem [shape: f32[2,256], index: 1, kind: input, shape index: {}]
  %s2 = inlined_call_operand.vmem [shape: f32[1,256], index: 2, kind: input, shape index: {}]
  %s3 = inlined_call_operand.vmem [shape: f32[1,256], index: 3, kind: input, shape index: {}]
  %s4 = inlined_call_operand.vmem [shape: bf16[256,128], index: 4, kind: input, shape index: {}]
  %s5 = inlined_call_operand.vmem [shape: f32[512,128], index: 5, kind: output, shape index: {0}]
  %s6 = inlined_call_operand.vmem [shape: f32[2,128], index: 6, kind: output, shape index: {1}]
  %7 = xla_tuple %s5, %s6
  %s8 = sld [smem:[#allocation0]]
  $region65: #{branch_forward.4} parent=0
    _
  %s10 = ssub.s32 1, %s8
  %s11 = scalar_select 0, %s10, %s8
  loop: start=0, step=1, limit=6
  $region2: #{branch_forward.4} parent=0 // loop_pre_header
    _
  $region3: #{branch_forward.4} parent=0 // loop_header
    %s13 = sphi 0, %s17
    %p14 = scmp.ge.s32.totalorder %s13, 6
    %s23 = sphi 0, %s25
    %s26 = sphi 0, %s23
    %s27 = sphi 0, %s26
    %s43 = sphi 0, %s27
    %s47 = sphi 0, %s47
    %s49 = sphi 0, %s47
    %s50 = sphi 0, %s49
    %s64 = sphi 0, %s50
    %s68 = sphi 0, %s68
    %s70 = sphi 0, %s68
    %s71 = sphi 0, %s70
    %s85 = sphi 0, %s71
    %s89 = sphi 0, %s89
    %s91 = sphi 0, %s89
    %s92 = sphi 0, %s91
    %s106 = sphi 0, %s92
    %s110 = sphi 0, %s110
    %s112 = sphi 0, %s110
    %s113 = sphi 0, %s112
    %s127 = sphi 0, %s113
    %s133 = sphi 0, %s135
    %s136 = sphi 0, %s133
    %s137 = sphi 0, %s136
    %s153 = sphi 0, %s137
    %s157 = sphi 0, %s157
    %s159 = sphi 0, %s157
    %s160 = sphi 0, %s159
    %s174 = sphi 0, %s160
  $region4: #{branch_forward.4} parent=0 // loop_header_branch
    %16 = sbr.rel (%p14) target = $region8
  $region5: #{branch_forward.4} parent=0 // loop_body
    %s18 = ssub.s32 %s13, 1
    %s19 = ssub.s32 %s13, 2
    %s20 = sadd.s32 %s13, 1
    %s21 = ssub.s32 %s13, %s20
    %p22 = scmp.eq.s32.totalorder %s21, 0
    %s24 = sadd.s32 %s23, 1
    %s25 = scalar_select %p22, %s23, %s24
    %p28 = pneg %p22
    %p29 = scmp.eq.s32.totalorder %s13, 3
    %p30 = por %p28, %p29
    %p31 = scmp.ne.s32.totalorder %s23, %s26
    %p32 = scmp.eq.s32.totalorder %s13, 0
    %p33 = por %p31, %p32
    %p34 = scmp.ne.s32.totalorder %s23, %s26
    %p35 = scmp.eq.s32.totalorder %s18, 3
    %p36 = por %p34, %p35
    %p37 = scmp.ne.s32.totalorder %s26, %s27
    %p38 = scmp.eq.s32.totalorder %s18, 0
    %p39 = por %p37, %p38
    %p40 = scmp.ne.s32.totalorder %s26, %s27
    %p41 = scmp.eq.s32.totalorder %s19, 3
    %p42 = por %p40, %p41
    %p44 = scmp.ne.s32.totalorder %s27, %s43
    %p45 = scmp.eq.s32.totalorder %s19, 0
    %p46 = por %p44, %p45
    %s48 = sadd.s32 %s47, 1
    %p51 = scmp.eq.s32.totalorder %s13, 3
    %p52 = scmp.ne.s32.totalorder %s47, %s49
    %p53 = scmp.eq.s32.totalorder %s13, 0
    %p54 = por %p52, %p53
    %p55 = scmp.ne.s32.totalorder %s47, %s49
    %p56 = scmp.eq.s32.totalorder %s18, 3
    %p57 = por %p55, %p56
    %p58 = scmp.ne.s32.totalorder %s49, %s50
    %p59 = scmp.eq.s32.totalorder %s18, 0
    %p60 = por %p58, %p59
    %p61 = scmp.ne.s32.totalorder %s49, %s50
    %p62 = scmp.eq.s32.totalorder %s19, 3
    %p63 = por %p61, %p62
    %p65 = scmp.ne.s32.totalorder %s50, %s64
    %p66 = scmp.eq.s32.totalorder %s19, 0
    %p67 = por %p65, %p66
    %s69 = sadd.s32 %s68, 1
    %p72 = scmp.eq.s32.totalorder %s13, 3
    %p73 = scmp.ne.s32.totalorder %s68, %s70
    %p74 = scmp.eq.s32.totalorder %s13, 0
    %p75 = por %p73, %p74
    %p76 = scmp.ne.s32.totalorder %s68, %s70
    %p77 = scmp.eq.s32.totalorder %s18, 3
    %p78 = por %p76, %p77
    %p79 = scmp.ne.s32.totalorder %s70, %s71
    %p80 = scmp.eq.s32.totalorder %s18, 0
    %p81 = por %p79, %p80
    %p82 = scmp.ne.s32.totalorder %s70, %s71
    %p83 = scmp.eq.s32.totalorder %s19, 3
    %p84 = por %p82, %p83
    %p86 = scmp.ne.s32.totalorder %s71, %s85
    %p87 = scmp.eq.s32.totalorder %s19, 0
    %p88 = por %p86, %p87
    %s90 = sadd.s32 %s89, 1
    %p93 = scmp.eq.s32.totalorder %s13, 3
    %p94 = scmp.ne.s32.totalorder %s89, %s91
    %p95 = scmp.eq.s32.totalorder %s13, 0
    %p96 = por %p94, %p95
    %p97 = scmp.ne.s32.totalorder %s89, %s91
    %p98 = scmp.eq.s32.totalorder %s18, 3
    %p99 = por %p97, %p98
    %p100 = scmp.ne.s32.totalorder %s91, %s92
    %p101 = scmp.eq.s32.totalorder %s18, 0
    %p102 = por %p100, %p101
    %p103 = scmp.ne.s32.totalorder %s91, %s92
    %p104 = scmp.eq.s32.totalorder %s19, 3
    %p105 = por %p103, %p104
    %p107 = scmp.ne.s32.totalorder %s92, %s106
    %p108 = scmp.eq.s32.totalorder %s19, 0
    %p109 = por %p107, %p108
    %s111 = sadd.s32 %s110, 1
    %p114 = scmp.eq.s32.totalorder %s13, 3
    %p115 = scmp.ne.s32.totalorder %s110, %s112
    %p116 = scmp.eq.s32.totalorder %s13, 0
    %p117 = por %p115, %p116
    %p118 = scmp.ne.s32.totalorder %s110, %s112
    %p119 = scmp.eq.s32.totalorder %s18, 3
    %p120 = por %p118, %p119
    %p121 = scmp.ne.s32.totalorder %s112, %s113
    %p122 = scmp.eq.s32.totalorder %s18, 0
    %p123 = por %p121, %p122
    %p124 = scmp.ne.s32.totalorder %s112, %s113
    %p125 = scmp.eq.s32.totalorder %s19, 3
    %p126 = por %p124, %p125
    %p128 = scmp.ne.s32.totalorder %s113, %s127
    %p129 = scmp.eq.s32.totalorder %s19, 0
    %p130 = por %p128, %p129
    %s131 = ssub.s32 %s13, %s20
    %p132 = scmp.eq.s32.totalorder %s131, 0
    %s134 = sadd.s32 %s133, 1
    %s135 = scalar_select %p132, %s133, %s134
    %p138 = pneg %p132
    %p139 = scmp.eq.s32.totalorder %s13, 3
    %p140 = por %p138, %p139
    %p141 = scmp.ne.s32.totalorder %s133, %s136
    %p142 = scmp.eq.s32.totalorder %s13, 0
    %p143 = por %p141, %p142
    %p144 = scmp.ne.s32.totalorder %s133, %s136
    %p145 = scmp.eq.s32.totalorder %s18, 3
    %p146 = por %p144, %p145
    %p147 = scmp.ne.s32.totalorder %s136, %s137
    %p148 = scmp.eq.s32.totalorder %s18, 0
    %p149 = por %p147, %p148
    %p150 = scmp.ne.s32.totalorder %s136, %s137
    %p151 = scmp.eq.s32.totalorder %s19, 3
    %p152 = por %p150, %p151
    %p154 = scmp.ne.s32.totalorder %s137, %s153
    %p155 = scmp.eq.s32.totalorder %s19, 0
    %p156 = por %p154, %p155
    %s158 = sadd.s32 %s157, 1
    %p161 = scmp.eq.s32.totalorder %s13, 3
    %p162 = scmp.ne.s32.totalorder %s157, %s159
    %p163 = scmp.eq.s32.totalorder %s13, 0
    %p164 = por %p162, %p163
    %p165 = scmp.ne.s32.totalorder %s157, %s159
    %p166 = scmp.eq.s32.totalorder %s18, 3
    %p167 = por %p165, %p166
    %p168 = scmp.ne.s32.totalorder %s159, %s160
    %p169 = scmp.eq.s32.totalorder %s18, 0
    %p170 = por %p168, %p169
    %p171 = scmp.ne.s32.totalorder %s159, %s160
    %p172 = scmp.eq.s32.totalorder %s19, 3
    %p173 = por %p171, %p172
    %p175 = scmp.ne.s32.totalorder %s160, %s174
    %p176 = scmp.eq.s32.totalorder %s19, 0
    %p177 = por %p175, %p176
    %p178 = scmp.le.s32.totalorder 1, %s13
    %p179 = scmp.lt.s32.totalorder %s13, 5
    %p180 = pnand %p178, %p179
    %p181 = pneg %p180
    // Predicated region
    $region9: #{branch_forward.4} parent=5 // pred_check
      _
    $region10: #{branch_forward.4} parent=5 // pred_check_branch
      %183 = sbr.rel (%p180) target = $region12
    $region11: #{branch_forward.4} parent=5 // pred_region
      %s184 = ssub.s32 %s13, 1
      // Predicated region
      $region13: #{branch_forward.4} parent=11 // pred_check
        %p185 = pneg %p60
      $region14: #{branch_forward.4} parent=11 // pred_check_branch
        %187 = sbr.rel (%p185) target = $region16
      $region15: #{branch_forward.4} parent=11 // pred_region
        _
      $region16: #{branch_forward.4} parent=11 // pred_fallthru
        _
      // Predicated region
      $region17: #{branch_forward.4} parent=11 // pred_check
        %p188 = pneg %p81
      $region18: #{branch_forward.4} parent=11 // pred_check_branch
        %190 = sbr.rel (%p188) target = $region20
      $region19: #{branch_forward.4} parent=11 // pred_region
        _
      $region20: #{branch_forward.4} parent=11 // pred_fallthru
        _
      // Predicated region
      $region21: #{branch_forward.4} parent=11 // pred_check
        %p191 = pneg %p102
      $region22: #{branch_forward.4} parent=11 // pred_check_branch
        %193 = sbr.rel (%p191) target = $region24
      $region23: #{branch_forward.4} parent=11 // pred_region
        _
      $region24: #{branch_forward.4} parent=11 // pred_fallthru
        _
      // Predicated region
      $region25: #{branch_forward.4} parent=11 // pred_check
        %p194 = pneg %p123
      $region26: #{branch_forward.4} parent=11 // pred_check_branch
        %196 = sbr.rel (%p194) target = $region28
      $region27: #{branch_forward.4} parent=11 // pred_region
        _
      $region28: #{branch_forward.4} parent=11 // pred_fallthru
        _
    $region12: #{branch_forward.4} parent=5 // pred_fallthru
      _
    %p197 = scmp.lt.s32.totalorder %s13, 4
    // Predicated region
    $region29: #{branch_forward.4} parent=5 // pred_check
      %p198 = pneg %p197
    $region30: #{branch_forward.4} parent=5 // pred_check_branch
      %200 = sbr.rel (%p198) target = $region32
    $region31: #{branch_forward.4} parent=5 // pred_region
      // Predicated region
      $region33: #{branch_forward.4} parent=31 // pred_check
        %p201 = pneg %p33
      $region34: #{branch_forward.4} parent=31 // pred_check_branch
        %203 = sbr.rel (%p201) target = $region36
      $region35: #{branch_forward.4} parent=31 // pred_region
        %s204 = smul.u32 16, %s13
        %p205 = scmp.lt.s32.totalorder %s204, 63
        %s206 = scalar_select %p205, %s204, 63
        %s207 = smul.addr %s206, 2
        %s208 = smul.addr %s207, 4
        %s209 = scalar_lea.vmem %s0, %s208
        %s210 = smul.u32 16, %s13
      $region36: #{branch_forward.4} parent=31 // pred_fallthru
        _
    $region32: #{branch_forward.4} parent=5 // pred_fallthru
      _
    %p211 = scmp.le.s32.totalorder 1, %s13
    %p212 = scmp.lt.s32.totalorder %s13, 5
    %p213 = pnand %p211, %p212
    %p214 = pneg %p213
    // Predicated region
    $region37: #{branch_forward.4} parent=5 // pred_check
      _
    $region38: #{branch_forward.4} parent=5 // pred_check_branch
      %216 = sbr.rel (%p213) target = $region40
    $region39: #{branch_forward.4} parent=5 // pred_region
      %s217 = ssub.s32 %s13, 1
      %s218 = smul.u32 16, %s18
      %p219 = scmp.lt.s32.totalorder %s218, 63
      %s220 = scalar_select %p219, %s218, 63
      %s221 = smul.addr %s220, 2
      %s222 = smul.addr %s221, 4
      %s223 = scalar_lea.vmem %s0, %s222
      %p224 = pneg %p39
      %p225 = pneg %p36
      %p226 = pneg %p60
      %p227 = pneg %p57
      %p228 = pneg %p81
      %p229 = pneg %p78
      %p230 = pneg %p102
      %p231 = pneg %p99
      %p232 = pneg %p123
      %p233 = pneg %p120
      %p234 = pneg %p149
      %p235 = pneg %p146
      %s236 = smul.u32 16, %s18
      %p237 = scmp.lt.s32.totalorder %s236, 63
      %s238 = scalar_select %p237, %s236, 63
      %s239 = smul.addr %s238, 8
      %s240 = scalar_lea.vmem %s5, %s239
      %p241 = pneg %p170
      %p242 = pneg %p167
      %s243 = smul.u32 16, %s18
      %p244 = scmp.lt.s32.totalorder %s243, 63
      %s245 = scalar_select %p244, %s243, 63
      %s246 = smul.addr %s245, 2
      %s247 = smul.addr %s246, 4
      %s248 = scalar_lea.vmem %s0, %s247
      %s249 = smul.u32 16, %s18
      %s250 = smul.u32 16, %s18
      %p251 = scmp.lt.s32.totalorder %s250, 63
      %s252 = scalar_select %p251, %s250, 63
      %s253 = smul.addr %s252, 8
      %s254 = scalar_lea.vmem %s5, %s253
      %s255 = smul.u32 16, %s18
      %p257 = scmp.eq.s32.totalorder %s18, 0
      // Predicated region
      $region41: #{branch_forward.4} parent=39 // pred_check
        %p258 = pneg %p257
      $region42: #{branch_forward.4} parent=39 // pred_check_branch
        %260 = sbr.rel (%p258) target = $region44
      $region43: #{branch_forward.4} parent=39 // pred_region
        %261 = vst [vmem:[%s6] sm:$0x3] 0.0
      $region44: #{branch_forward.4} parent=39 // pred_fallthru
        _
      %v262 = vld [vmem:[%s1] sm:$0xf]
      %v263 = vmul.f32 %v262, 0.001953125
      %v264 = vmul.f32 %v263, %v263
      %v266 = vrot.slane %v264, 7
      %v268 = vsub.f32 %v263, %v266
      %v269 = vld [vmem:[%s2] sm:$0x3]
      %v270 = vadd.f32 %v268, 1e-05
      %v271 = vrsqrt.pop %v270
      %v274 = vunpack.c.l.s4 1966171168
      %v275 = vunpack.c.0.s8 %v274
      %v276 = vlaneseq
      %v277 = vshrl.u32 %v276, 7
      %v278 = vsub.s32 %v275, %v277
      %v279 = vrot.slane %v271, %v278
      %v280 = vcombine.high %v279, %v279
      %v282 = vmul.f32 %v269, %v280
      %v283 = vld [vmem:[%s3] sm:$0x3]
      %v286 = vunpack.c.l.s4 857870592
      %v287 = vunpack.c.0.s8 %v286
      %v288 = vlaneseq
      %v289 = vshrl.u32 %v288, 7
      %v290 = vsub.s32 %v287, %v289
      %v291 = vrot.slane %v282, %v290
      %v293 = vmul.f32 %v263, %v291
      %v296 = vunpack.c.l.s4 1966171168
      %v297 = vunpack.c.0.s8 %v296
      %v298 = vlaneseq
      %v299 = vshrl.u32 %v298, 7
      %v300 = vsub.s32 %v297, %v299
      %v301 = vrot.slane %v293, %v300
      %v303 = vsub.f32 %v283, %v301
      %v304 = vld [vmem:[%s248] sm:$0xff]
      %v305 = vld [vmem:[%s248 + $0x8] sm:$0xff]
      %v306 = vld [vmem:[%s248 + $0x10] sm:$0xff]
      %v307 = vld [vmem:[%s248 + $0x18] sm:$0xff]
      %v308 = vld [vmem:[%s248 + $0x20] sm:$0xff]
      %v309 = vld [vmem:[%s248 + $0x28] sm:$0xff]
      %v310 = vld [vmem:[%s248 + $0x30] sm:$0xff]
      %v311 = vld [vmem:[%s248 + $0x38] sm:$0xff]
      %v312 = vld [vmem:[%s248 + $0x40] sm:$0xff]
      %v313 = vld [vmem:[%s248 + $0x48] sm:$0xff]
      %v314 = vld [vmem:[%s248 + $0x50] sm:$0xff]
      %v315 = vld [vmem:[%s248 + $0x58] sm:$0xff]
      %v316 = vld [vmem:[%s248 + $0x60] sm:$0xff]
      %v317 = vld [vmem:[%s248 + $0x68] sm:$0xff]
      %v318 = vld [vmem:[%s248 + $0x70] sm:$0xff]
      %v319 = vld [vmem:[%s248 + $0x78] sm:$0xff]
      %v320 = vunpack.c.l.bf16 %v304
      %v321 = vunpack.c.h.bf16 %v304
      %v322 = vunpack.c.l.bf16 %v305
      %v323 = vunpack.c.h.bf16 %v305
      %v324 = vunpack.c.l.bf16 %v306
      %v325 = vunpack.c.h.bf16 %v306
      %v326 = vunpack.c.l.bf16 %v307
      %v327 = vunpack.c.h.bf16 %v307
      %v328 = vunpack.c.l.bf16 %v308
      %v329 = vunpack.c.h.bf16 %v308
      %v330 = vunpack.c.l.bf16 %v309
      %v331 = vunpack.c.h.bf16 %v309
      %v332 = vunpack.c.l.bf16 %v310
      %v333 = vunpack.c.h.bf16 %v310
      %v334 = vunpack.c.l.bf16 %v311
      %v335 = vunpack.c.h.bf16 %v311
      %v336 = vunpack.c.l.bf16 %v312
      %v337 = vunpack.c.h.bf16 %v312
      %v338 = vunpack.c.l.bf16 %v313
      %v339 = vunpack.c.h.bf16 %v313
      %v340 = vunpack.c.l.bf16 %v314
      %v341 = vunpack.c.h.bf16 %v314
      %v342 = vunpack.c.l.bf16 %v315
      %v343 = vunpack.c.h.bf16 %v315
      %v344 = vunpack.c.l.bf16 %v316
      %v345 = vunpack.c.h.bf16 %v316
      %v346 = vunpack.c.l.bf16 %v317
      %v347 = vunpack.c.h.bf16 %v317
      %v348 = vunpack.c.l.bf16 %v318
      %v349 = vunpack.c.h.bf16 %v318
      %v350 = vunpack.c.l.bf16 %v319
      %v351 = vunpack.c.h.bf16 %v319
      %v352 = vlaneseq
      %v353 = vshrl.u32 %v352, 7
      %v354 = vsub.s32 0, %v353
      %v355 = vrot.slane %v282, %v354
      %v356 = vlaneseq
      %v357 = vshrl.u32 %v356, 7
      %v358 = vsub.s32 1, %v357
      %v359 = vrot.slane %v282, %v358
      %v362 = vmul.f32 %v320, %v355
      %v363 = vmul.f32 %v321, %v359
      %v364 = vmul.f32 %v322, %v355
      %v365 = vmul.f32 %v323, %v359
      %v366 = vmul.f32 %v324, %v355
      %v367 = vmul.f32 %v325, %v359
      %v368 = vmul.f32 %v326, %v355
      %v369 = vmul.f32 %v327, %v359
      %v370 = vmul.f32 %v328, %v355
      %v371 = vmul.f32 %v329, %v359
      %v372 = vmul.f32 %v330, %v355
      %v373 = vmul.f32 %v331, %v359
      %v374 = vmul.f32 %v332, %v355
      %v375 = vmul.f32 %v333, %v359
      %v376 = vmul.f32 %v334, %v355
      %v377 = vmul.f32 %v335, %v359
      %v378 = vmul.f32 %v336, %v355
      %v379 = vmul.f32 %v337, %v359
      %v380 = vmul.f32 %v338, %v355
      %v381 = vmul.f32 %v339, %v359
      %v382 = vmul.f32 %v340, %v355
      %v383 = vmul.f32 %v341, %v359
      %v384 = vmul.f32 %v342, %v355
      %v385 = vmul.f32 %v343, %v359
      %v386 = vmul.f32 %v344, %v355
      %v387 = vmul.f32 %v345, %v359
      %v388 = vmul.f32 %v346, %v355
      %v389 = vmul.f32 %v347, %v359
      %v390 = vmul.f32 %v348, %v355
      %v391 = vmul.f32 %v349, %v359
      %v392 = vmul.f32 %v350, %v355
      %v393 = vmul.f32 %v351, %v359
      %v395 = vlaneseq
      %v396 = vshrl.u32 %v395, 7
      %v397 = vsub.s32 0, %v396
      %v398 = vrot.slane %v303, %v397
      %v399 = vlaneseq
      %v400 = vshrl.u32 %v399, 7
      %v401 = vsub.s32 1, %v400
      %v402 = vrot.slane %v303, %v401
      %v405 = vadd.f32 %v362, %v398
      %v406 = vadd.f32 %v363, %v402
      %v407 = vadd.f32 %v364, %v398
      %v408 = vadd.f32 %v365, %v402
      %v409 = vadd.f32 %v366, %v398
      %v410 = vadd.f32 %v367, %v402
      %v411 = vadd.f32 %v368, %v398
      %v412 = vadd.f32 %v369, %v402
      %v413 = vadd.f32 %v370, %v398
      %v414 = vadd.f32 %v371, %v402
      %v415 = vadd.f32 %v372, %v398
      %v416 = vadd.f32 %v373, %v402
      %v417 = vadd.f32 %v374, %v398
      %v418 = vadd.f32 %v375, %v402
      %v419 = vadd.f32 %v376, %v398
      %v420 = vadd.f32 %v377, %v402
      %v421 = vadd.f32 %v378, %v398
      %v422 = vadd.f32 %v379, %v402
      %v423 = vadd.f32 %v380, %v398
      %v424 = vadd.f32 %v381, %v402
      %v425 = vadd.f32 %v382, %v398
      %v426 = vadd.f32 %v383, %v402
      %v427 = vadd.f32 %v384, %v398
      %v428 = vadd.f32 %v385, %v402
      %v429 = vadd.f32 %v386, %v398
      %v430 = vadd.f32 %v387, %v402
      %v431 = vadd.f32 %v388, %v398
      %v432 = vadd.f32 %v389, %v402
      %v433 = vadd.f32 %v390, %v398
      %v434 = vadd.f32 %v391, %v402
      %v435 = vadd.f32 %v392, %v398
      %v436 = vadd.f32 %v393, %v402
      %v437 = vmax.f32 %v405, 0.0
      %v438 = vmax.f32 %v406, 0.0
      %v439 = vmax.f32 %v407, 0.0
      %v440 = vmax.f32 %v408, 0.0
      %v441 = vmax.f32 %v409, 0.0
      %v442 = vmax.f32 %v410, 0.0
      %v443 = vmax.f32 %v411, 0.0
      %v444 = vmax.f32 %v412, 0.0
      %v445 = vmax.f32 %v413, 0.0
      %v446 = vmax.f32 %v414, 0.0
      %v447 = vmax.f32 %v415, 0.0
      %v448 = vmax.f32 %v416, 0.0
      %v449 = vmax.f32 %v417, 0.0
      %v450 = vmax.f32 %v418, 0.0
      %v451 = vmax.f32 %v419, 0.0
      %v452 = vmax.f32 %v420, 0.0
      %v453 = vmax.f32 %v421, 0.0
      %v454 = vmax.f32 %v422, 0.0
      %v455 = vmax.f32 %v423, 0.0
      %v456 = vmax.f32 %v424, 0.0
      %v457 = vmax.f32 %v425, 0.0
      %v458 = vmax.f32 %v426, 0.0
      %v459 = vmax.f32 %v427, 0.0
      %v460 = vmax.f32 %v428, 0.0
      %v461 = vmax.f32 %v429, 0.0
      %v462 = vmax.f32 %v430, 0.0
      %v463 = vmax.f32 %v431, 0.0
      %v464 = vmax.f32 %v432, 0.0
      %v465 = vmax.f32 %v433, 0.0
      %v466 = vmax.f32 %v434, 0.0
      %v467 = vmax.f32 %v435, 0.0
      %v468 = vmax.f32 %v436, 0.0
      %v469 = vpack.c.bf16 %v439, %v437
      %v470 = vpack.c.bf16 %v440, %v438
      %v471 = vpack.c.bf16 %v443, %v441
      %v472 = vpack.c.bf16 %v444, %v442
      %v473 = vpack.c.bf16 %v447, %v445
      %v474 = vpack.c.bf16 %v448, %v446
      %v475 = vpack.c.bf16 %v451, %v449
      %v476 = vpack.c.bf16 %v452, %v450
      %v477 = vpack.c.bf16 %v455, %v453
      %v478 = vpack.c.bf16 %v456, %v454
      %v479 = vpack.c.bf16 %v459, %v457
      %v480 = vpack.c.bf16 %v460, %v458
      %v481 = vpack.c.bf16 %v463, %v461
      %v482 = vpack.c.bf16 %v464, %v462
      %v483 = vpack.c.bf16 %v467, %v465
      %v484 = vpack.c.bf16 %v468, %v466
      %v485 = vld [vmem:[%s4] sm:$0xf]
      %v486 = vld [vmem:[%s4 + $0x4] sm:$0xf]
      %v487 = vld [vmem:[%s4 + $0x8] sm:$0xf]
      %v488 = vld [vmem:[%s4 + $0xc] sm:$0xf]
      %v489 = vld [vmem:[%s4 + $0x10] sm:$0xf]
      %v490 = vld [vmem:[%s4 + $0x14] sm:$0xf]
      %v491 = vld [vmem:[%s4 + $0x18] sm:$0xf]
      %v492 = vld [vmem:[%s4 + $0x1c] sm:$0xf]
      %v493 = vld [vmem:[%s4 + $0x20] sm:$0xf]
      %v494 = vld [vmem:[%s4 + $0x24] sm:$0xf]
      %v495 = vld [vmem:[%s4 + $0x28] sm:$0xf]
      %v496 = vld [vmem:[%s4 + $0x2c] sm:$0xf]
      %v497 = vld [vmem:[%s4 + $0x30] sm:$0xf]
      %v498 = vld [vmem:[%s4 + $0x34] sm:$0xf]
      %v499 = vld [vmem:[%s4 + $0x38] sm:$0xf]
      %v500 = vld [vmem:[%s4 + $0x3c] sm:$0xf]
      %v501 = vld [vmem:[%s4 + $0x40] sm:$0xf]
      %v502 = vld [vmem:[%s4 + $0x44] sm:$0xf]
      %v503 = vld [vmem:[%s4 + $0x48] sm:$0xf]
      %v504 = vld [vmem:[%s4 + $0x4c] sm:$0xf]
      %v505 = vld [vmem:[%s4 + $0x50] sm:$0xf]
      %v506 = vld [vmem:[%s4 + $0x54] sm:$0xf]
      %v507 = vld [vmem:[%s4 + $0x58] sm:$0xf]
      %v508 = vld [vmem:[%s4 + $0x5c] sm:$0xf]
      %v509 = vld [vmem:[%s4 + $0x60] sm:$0xf]
      %v510 = vld [vmem:[%s4 + $0x64] sm:$0xf]
      %v511 = vld [vmem:[%s4 + $0x68] sm:$0xf]
      %v512 = vld [vmem:[%s4 + $0x6c] sm:$0xf]
      %v513 = vld [vmem:[%s4 + $0x70] sm:$0xf]
      %v514 = vld [vmem:[%s4 + $0x74] sm:$0xf]
      %v515 = vld [vmem:[%s4 + $0x78] sm:$0xf]
      %v516 = vld [vmem:[%s4 + $0x7c] sm:$0xf]
      %v549 = vunpack.c.l.b16 %v485
      %v550 = vunpack.c.l.b16 %v486
      %v551 = vunpack.c.l.b16 %v487
      %v552 = vunpack.c.l.b16 %v488
      %v553 = vunpack.c.l.b16 %v489
      %v554 = vunpack.c.l.b16 %v490
      %v555 = vunpack.c.l.b16 %v491
      %v556 = vunpack.c.l.b16 %v492
      %v557 = vunpack.c.l.b16 %v493
      %v558 = vunpack.c.l.b16 %v494
      %v559 = vunpack.c.l.b16 %v495
      %v560 = vunpack.c.l.b16 %v496
      %v561 = vunpack.c.l.b16 %v497
      %v562 = vunpack.c.l.b16 %v498
      %v563 = vunpack.c.l.b16 %v499
      %v564 = vunpack.c.l.b16 %v500
      %v565 = vunpack.c.l.b16 %v501
      %v566 = vunpack.c.l.b16 %v502
      %v567 = vunpack.c.l.b16 %v503
      %v568 = vunpack.c.l.b16 %v504
      %v569 = vunpack.c.l.b16 %v505
      %v570 = vunpack.c.l.b16 %v506
      %v571 = vunpack.c.l.b16 %v507
      %v572 = vunpack.c.l.b16 %v508
      %v573 = vunpack.c.l.b16 %v509
      %v574 = vunpack.c.l.b16 %v510
      %v575 = vunpack.c.l.b16 %v511
      %v576 = vunpack.c.l.b16 %v512
      %v577 = vunpack.c.l.b16 %v513
      %v578 = vunpack.c.l.b16 %v514
      %v579 = vunpack.c.l.b16 %v515
      %v580 = vunpack.c.l.b16 %v516
      %v581 = vpack.c.b16 %v550, %v549
      %v582 = vpack.c.b16 %v552, %v551
      %v583 = vpack.c.b16 %v554, %v553
      %v584 = vpack.c.b16 %v556, %v555
      %v585 = vpack.c.b16 %v558, %v557
      %v586 = vpack.c.b16 %v560, %v559
      %v587 = vpack.c.b16 %v562, %v561
      %v588 = vpack.c.b16 %v564, %v563
      %v589 = vpack.c.b16 %v566, %v565
      %v590 = vpack.c.b16 %v568, %v567
      %v591 = vpack.c.b16 %v570, %v569
      %v592 = vpack.c.b16 %v572, %v571
      %v593 = vpack.c.b16 %v574, %v573
      %v594 = vpack.c.b16 %v576, %v575
      %v595 = vpack.c.b16 %v578, %v577
      %v596 = vpack.c.b16 %v580, %v579
      %613 = vmatprep.subr.bf16.mxu0 0
      %614 = vmatpush1.bf16.msra.mxu0 %v588
      %615 = vmatprep.subr.bf16.mxu0 0
      %616 = vmatpush1.bf16.msra.mxu0 %v587
      %617 = vmatprep.subr.bf16.mxu0 0
      %618 = vmatpush1.bf16.msra.mxu0 %v586
      %619 = vmatprep.subr.bf16.mxu0 0
      %620 = vmatpush1.bf16.msra.mxu0 %v585
      %621 = vmatprep.subr.bf16.mxu0 0
      %622 = vmatpush1.bf16.msra.mxu0 %v584
      %623 = vmatprep.subr.bf16.mxu0 0
      %624 = vmatpush1.bf16.msra.mxu0 %v583
      %625 = vmatprep.subr.bf16.mxu0 0
      %626 = vmatpush1.bf16.msra.mxu0 %v582
      %627 = vmatprep.subr.bf16.mxu0 0
      %628 = vmatpush1.bf16.msra.mxu0 %v581
      %629 = vmatprep.subr.bf16.mxu0 0
      %630 = vmatpush2.bf16.msra.mxu0 %v596
      %631 = vmatprep.subr.bf16.mxu0 0
      %632 = vmatpush2.bf16.msra.mxu0 %v595
      %633 = vmatprep.subr.bf16.mxu0 0
      %634 = vmatpush2.bf16.msra.mxu0 %v594
      %635 = vmatprep.subr.bf16.mxu0 0
      %636 = vmatpush2.bf16.msra.mxu0 %v593
      %637 = vmatprep.subr.bf16.mxu0 0
      %638 = vmatpush2.bf16.msra.mxu0 %v592
      %639 = vmatprep.subr.bf16.mxu0 0
      %640 = vmatpush2.bf16.msra.mxu0 %v591
      %641 = vmatprep.subr.bf16.mxu0 0
      %642 = vmatpush2.bf16.msra.mxu0 %v590
      %643 = vmatprep.subr.bf16.mxu0 0
      %644 = vmatpush2.bf16.msra.mxu0 %v589
      %645 = vmatprep.mubr.bf16.mxu0 %v470
      %646 = vmatmul.mubr.bf16.gmra.mxu0 %v469
      %v647 = vpop.f32.mrf.mxu0
      %v648 = vadd.f32 0.0, %v647
      %v649 = vpop.f32.mrf.mxu0
      %v650 = vpop.f32.mrf.mxu0
      %v651 = vadd.f32 0.0, %v650
      %v652 = vpop.f32.mrf.mxu0
      %653 = vmatprep.mubr.bf16.mxu0 %v472
      %654 = vmatmul.mubr.bf16.gmra.mxu0 %v471
      %v655 = vpop.f32.mrf.mxu0
      %v656 = vadd.f32 0.0, %v655
      %v657 = vpop.f32.mrf.mxu0
      %v658 = vpop.f32.mrf.mxu0
      %v659 = vadd.f32 0.0, %v658
      %v660 = vpop.f32.mrf.mxu0
      %661 = vmatprep.mubr.bf16.mxu0 %v474
      %662 = vmatmul.mubr.bf16.gmra.mxu0 %v473
      %v663 = vpop.f32.mrf.mxu0
      %v664 = vadd.f32 0.0, %v663
      %v665 = vpop.f32.mrf.mxu0
      %v666 = vpop.f32.mrf.mxu0
      %v667 = vadd.f32 0.0, %v666
      %v668 = vpop.f32.mrf.mxu0
      %669 = vmatprep.mubr.bf16.mxu0 %v476
      %670 = vmatmul.mubr.bf16.gmra.mxu0 %v475
      %v671 = vpop.f32.mrf.mxu0
      %v672 = vadd.f32 0.0, %v671
      %v673 = vpop.f32.mrf.mxu0
      %v674 = vpop.f32.mrf.mxu0
      %v675 = vadd.f32 0.0, %v674
      %v676 = vpop.f32.mrf.mxu0
      %677 = vmatprep.mubr.bf16.mxu0 %v478
      %678 = vmatmul.mubr.bf16.gmra.mxu0 %v477
      %v679 = vpop.f32.mrf.mxu0
      %v680 = vadd.f32 0.0, %v679
      %v681 = vpop.f32.mrf.mxu0
      %v682 = vpop.f32.mrf.mxu0
      %v683 = vadd.f32 0.0, %v682
      %v684 = vpop.f32.mrf.mxu0
      %685 = vmatprep.mubr.bf16.mxu0 %v480
      %686 = vmatmul.mubr.bf16.gmra.mxu0 %v479
      %v687 = vpop.f32.mrf.mxu0
      %v688 = vadd.f32 0.0, %v687
      %v689 = vpop.f32.mrf.mxu0
      %v690 = vpop.f32.mrf.mxu0
      %v691 = vadd.f32 0.0, %v690
      %v692 = vpop.f32.mrf.mxu0
      %693 = vmatprep.mubr.bf16.mxu0 %v482
      %694 = vmatmul.mubr.bf16.gmra.mxu0 %v481
      %v695 = vpop.f32.mrf.mxu0
      %v696 = vadd.f32 0.0, %v695
      %v697 = vpop.f32.mrf.mxu0
      %v698 = vpop.f32.mrf.mxu0
      %v699 = vadd.f32 0.0, %v698
      %v700 = vpop.f32.mrf.mxu0
      %701 = vmatprep.mubr.bf16.mxu0 %v484
      %702 = vmatmul.mubr.bf16.gmra.mxu0 %v483
      %v703 = vpop.f32.mrf.mxu0
      %v704 = vadd.f32 0.0, %v703
      %v705 = vpop.f32.mrf.mxu0
      %v706 = vpop.f32.mrf.mxu0
      %v707 = vadd.f32 0.0, %v706
      %v708 = vpop.f32.mrf.mxu0
      %709 = vdwg.mxu0
      %710 = vst [vmem:[%s254] sm:$0xff] %v648
      %711 = vst [vmem:[%s254 + $0x8] sm:$0xff] %v651
      %712 = vst [vmem:[%s254 + $0x10] sm:$0xff] %v656
      %713 = vst [vmem:[%s254 + $0x18] sm:$0xff] %v659
      %714 = vst [vmem:[%s254 + $0x20] sm:$0xff] %v664
      %715 = vst [vmem:[%s254 + $0x28] sm:$0xff] %v667
      %716 = vst [vmem:[%s254 + $0x30] sm:$0xff] %v672
      %717 = vst [vmem:[%s254 + $0x38] sm:$0xff] %v675
      %718 = vst [vmem:[%s254 + $0x40] sm:$0xff] %v680
      %719 = vst [vmem:[%s254 + $0x48] sm:$0xff] %v683
      %720 = vst [vmem:[%s254 + $0x50] sm:$0xff] %v688
      %721 = vst [vmem:[%s254 + $0x58] sm:$0xff] %v691
      %722 = vst [vmem:[%s254 + $0x60] sm:$0xff] %v696
      %723 = vst [vmem:[%s254 + $0x68] sm:$0xff] %v699
      %724 = vst [vmem:[%s254 + $0x70] sm:$0xff] %v704
      %725 = vst [vmem:[%s254 + $0x78] sm:$0xff] %v707
      %v726 = vadd.f32 %v648, %v651
      %v727 = vadd.f32 %v726, %v656
      %v728 = vadd.f32 %v727, %v659
      %v729 = vadd.f32 %v728, %v664
      %v730 = vadd.f32 %v729, %v667
      %v731 = vadd.f32 %v730, %v672
      %v732 = vadd.f32 %v731, %v675
      %v733 = vadd.f32 %v732, %v680
      %v734 = vadd.f32 %v733, %v683
      %v735 = vadd.f32 %v734, %v688
      %v736 = vadd.f32 %v735, %v691
      %v737 = vadd.f32 %v736, %v696
      %v738 = vadd.f32 %v737, %v699
      %v739 = vadd.f32 %v738, %v704
      %v740 = vadd.f32 %v739, %v707
      %v741 = vrot.slane %v740, 4
      %v742 = vadd.f32 %v740, %v741
      %v743 = vrot.slane %v742, 2
      %v744 = vadd.f32 %v742, %v743
      %v745 = vrot.slane %v744, 1
      %v746 = vadd.f32 %v744, %v745
      %v747 = vmul.f32 %v648, %v648
      %v748 = vmul.f32 %v651, %v651
      %v749 = vmul.f32 %v656, %v656
      %v750 = vmul.f32 %v659, %v659
      %v751 = vmul.f32 %v664, %v664
      %v752 = vmul.f32 %v667, %v667
      %v753 = vmul.f32 %v672, %v672
      %v754 = vmul.f32 %v675, %v675
      %v755 = vmul.f32 %v680, %v680
      %v756 = vmul.f32 %v683, %v683
      %v757 = vmul.f32 %v688, %v688
      %v758 = vmul.f32 %v691, %v691
      %v759 = vmul.f32 %v696, %v696
      %v760 = vmul.f32 %v699, %v699
      %v761 = vmul.f32 %v704, %v704
      %v762 = vmul.f32 %v707, %v707
      %v763 = vadd.f32 %v747, %v748
      %v764 = vadd.f32 %v763, %v749
      %v765 = vadd.f32 %v764, %v750
      %v766 = vadd.f32 %v765, %v751
      %v767 = vadd.f32 %v766, %v752
      %v768 = vadd.f32 %v767, %v753
      %v769 = vadd.f32 %v768, %v754
      %v770 = vadd.f32 %v769, %v755
      %v771 = vadd.f32 %v770, %v756
      %v772 = vadd.f32 %v771, %v757
      %v773 = vadd.f32 %v772, %v758
      %v774 = vadd.f32 %v773, %v759
      %v775 = vadd.f32 %v774, %v760
      %v776 = vadd.f32 %v775, %v761
      %v777 = vadd.f32 %v776, %v762
      %v778 = vrot.slane %v777, 4
      %v779 = vadd.f32 %v777, %v778
      %v780 = vrot.slane %v779, 2
      %v781 = vadd.f32 %v779, %v780
      %v782 = vrot.slane %v781, 1
      %v783 = vadd.f32 %v781, %v782
      %v784 = vld [vmem:[%s6] sm:$0x3]
      %vm785 = vcmask 1040384
      %v786 = vsel %vm785, %v746, %v783
      %v787 = vadd.f32 %v784, %v786
      %788 = vst [vmem:[%s6] sm:$0x3] %v787
      %s789 = smul.u32 16, %s18
      %p790 = scmp.lt.s32.totalorder %s789, 63
      %s791 = scalar_select %p790, %s789, 63
      %s792 = smul.addr %s791, 8
      %s793 = scalar_lea.vmem %s5, %s792
      // Predicated region
      $region45: #{branch_forward.4} parent=39 // pred_check
        %p794 = pneg %p146
      $region46: #{branch_forward.4} parent=39 // pred_check_branch
        %796 = sbr.rel (%p794) target = $region48
      $region47: #{branch_forward.4} parent=39 // pred_region
        %s797 = smul.u32 16, %s18
      $region48: #{branch_forward.4} parent=39 // pred_fallthru
        _
      // Predicated region
      $region49: #{branch_forward.4} parent=39 // pred_check
        %p798 = pneg %p167
      $region50: #{branch_forward.4} parent=39 // pred_check_branch
        %800 = sbr.rel (%p798) target = $region52
      $region51: #{branch_forward.4} parent=39 // pred_region
        _
      $region52: #{branch_forward.4} parent=39 // pred_fallthru
        _
      // Predicated region
      $region53: #{branch_forward.4} parent=39 // pred_check
        %p801 = pneg %p167
      $region54: #{branch_forward.4} parent=39 // pred_check_branch
        %803 = sbr.rel (%p801) target = $region56
      $region55: #{branch_forward.4} parent=39 // pred_region
        _
      $region56: #{branch_forward.4} parent=39 // pred_fallthru
        _
    $region40: #{branch_forward.4} parent=5 // pred_fallthru
      _
    %p804 = scmp.le.s32.totalorder 2, %s13
    // Predicated region
    $region57: #{branch_forward.4} parent=5 // pred_check
      %p805 = pneg %p804
    $region58: #{branch_forward.4} parent=5 // pred_check_branch
      %807 = sbr.rel (%p805) target = $region60
    $region59: #{branch_forward.4} parent=5 // pred_region
      %s808 = ssub.s32 %s13, 2
      // Predicated region
      $region61: #{branch_forward.4} parent=59 // pred_check
        %p809 = pneg %p152
      $region62: #{branch_forward.4} parent=59 // pred_check_branch
        %811 = sbr.rel (%p809) target = $region64
      $region63: #{branch_forward.4} parent=59 // pred_region
        %s812 = smul.u32 16, %s19
        %p813 = scmp.lt.s32.totalorder %s812, 63
        %s814 = scalar_select %p813, %s812, 63
        %s815 = smul.addr %s814, 8
        %s816 = scalar_lea.vmem %s5, %s815
      $region64: #{branch_forward.4} parent=59 // pred_fallthru
        _
    $region60: #{branch_forward.4} parent=5 // pred_fallthru
      _
  $region6: #{branch_forward.4} parent=0 // loop_footer
    %s17 = sadd.s32 1, %s13
  $region7: #{branch_forward.4} parent=0 // loop_footer_branch
    %12 = sbr.rel target = $region3
  $region8: #{branch_forward.4} parent=0 // loop_exit
    _

// kernel: branch_forward.3
$region0: #{branch_forward.3}
  #allocation0 [shape = 'u32[]', space=smem, size = 0x4, offset = 0x4, fixed_abs, tag = 'smem constant byte address 0x4 - core index']
  #allocation1 [shape = 'u32[144,128]{1,0:T(1,128)}', space=vmem, size = 0x12000, scoped, tag = 'internal scratch']
  %s0 = inlined_call_operand.hbm [shape: f32[512,512], index: 0, kind: input, shape index: {}]
  %s1 = inlined_call_operand.vmem [shape: bf16[512,256], index: 1, kind: input, shape index: {}]
  %s2 = inlined_call_operand.vmem [shape: bf16[512,256], index: 2, kind: output, shape index: {0}]
  %s3 = inlined_call_operand.vmem [shape: f32[2,256], index: 3, kind: output, shape index: {1}]
  %4 = xla_tuple %s2, %s3
  %s5 = sld [smem:[#allocation0]]
  $region57: #{branch_forward.3} parent=0
    _
  %s7 = ssub.s32 1, %s5
  %s8 = scalar_select 0, %s7, %s5
  $region1: #{branch_forward.3} parent=0
    #allocation2 [shape = 'u8[524288]{0}', space=vmem, size = 0x80000, scoped, tag = 'input window, operand 0']
    #allocation3 [shape = 's32[2]{0}', space=sflag, size = 0x8, scoped, tag = 'scoped memory for branch_forward.3']
    %9 = vsyncpa [#allocation3], 0
    %s10 = scalar_lea.sflag [#allocation3], 1
    %11 = vsyncpa %s10, 0
    loop: start=0, step=1, limit=6
    $region2: #{branch_forward.3} parent=1 // loop_pre_header
      _
    $region3: #{branch_forward.3} parent=1 // loop_header
      %s13 = sphi 0, %s17
      %p14 = scmp.ge.s32.totalorder %s13, 6
      %s23 = sphi 0, %s25
      %s26 = sphi 0, %s23
      %s27 = sphi 0, %s26
      %s43 = sphi 0, %s27
      %s47 = sphi 0, %s47
      %s49 = sphi 0, %s47
      %s50 = sphi 0, %s49
      %s64 = sphi 0, %s50
      %s70 = sphi 0, %s72
      %s73 = sphi 0, %s70
      %s74 = sphi 0, %s73
      %s90 = sphi 0, %s74
      %s94 = sphi 0, %s94
      %s96 = sphi 0, %s94
      %s97 = sphi 0, %s96
      %s111 = sphi 0, %s97
    $region4: #{branch_forward.3} parent=1 // loop_header_branch
      %16 = sbr.rel (%p14) target = $region8
    $region5: #{branch_forward.3} parent=1 // loop_body
      %s18 = ssub.s32 %s13, 1
      %s19 = ssub.s32 %s13, 2
      %s20 = sadd.s32 %s13, 1
      %s21 = ssub.s32 %s13, %s20
      %p22 = scmp.eq.s32.totalorder %s21, 0
      %s24 = sadd.s32 %s23, 1
      %s25 = scalar_select %p22, %s23, %s24
      %p28 = pneg %p22
      %p29 = scmp.eq.s32.totalorder %s13, 3
      %p30 = por %p28, %p29
      %p31 = scmp.ne.s32.totalorder %s23, %s26
      %p32 = scmp.eq.s32.totalorder %s13, 0
      %p33 = por %p31, %p32
      %p34 = scmp.ne.s32.totalorder %s23, %s26
      %p35 = scmp.eq.s32.totalorder %s18, 3
      %p36 = por %p34, %p35
      %p37 = scmp.ne.s32.totalorder %s26, %s27
      %p38 = scmp.eq.s32.totalorder %s18, 0
      %p39 = por %p37, %p38
      %p40 = scmp.ne.s32.totalorder %s26, %s27
      %p41 = scmp.eq.s32.totalorder %s19, 3
      %p42 = por %p40, %p41
      %p44 = scmp.ne.s32.totalorder %s27, %s43
      %p45 = scmp.eq.s32.totalorder %s19, 0
      %p46 = por %p44, %p45
      %s48 = sadd.s32 %s47, 1
      %p51 = scmp.eq.s32.totalorder %s13, 3
      %p52 = scmp.ne.s32.totalorder %s47, %s49
      %p53 = scmp.eq.s32.totalorder %s13, 0
      %p54 = por %p52, %p53
      %p55 = scmp.ne.s32.totalorder %s47, %s49
      %p56 = scmp.eq.s32.totalorder %s18, 3
      %p57 = por %p55, %p56
      %p58 = scmp.ne.s32.totalorder %s49, %s50
      %p59 = scmp.eq.s32.totalorder %s18, 0
      %p60 = por %p58, %p59
      %p61 = scmp.ne.s32.totalorder %s49, %s50
      %p62 = scmp.eq.s32.totalorder %s19, 3
      %p63 = por %p61, %p62
      %p65 = scmp.ne.s32.totalorder %s50, %s64
      %p66 = scmp.eq.s32.totalorder %s19, 0
      %p67 = por %p65, %p66
      %s68 = ssub.s32 %s13, %s20
      %p69 = scmp.eq.s32.totalorder %s68, 0
      %s71 = sadd.s32 %s70, 1
      %s72 = scalar_select %p69, %s70, %s71
      %p75 = pneg %p69
      %p76 = scmp.eq.s32.totalorder %s13, 3
      %p77 = por %p75, %p76
      %p78 = scmp.ne.s32.totalorder %s70, %s73
      %p79 = scmp.eq.s32.totalorder %s13, 0
      %p80 = por %p78, %p79
      %p81 = scmp.ne.s32.totalorder %s70, %s73
      %p82 = scmp.eq.s32.totalorder %s18, 3
      %p83 = por %p81, %p82
      %p84 = scmp.ne.s32.totalorder %s73, %s74
      %p85 = scmp.eq.s32.totalorder %s18, 0
      %p86 = por %p84, %p85
      %p87 = scmp.ne.s32.totalorder %s73, %s74
      %p88 = scmp.eq.s32.totalorder %s19, 3
      %p89 = por %p87, %p88
      %p91 = scmp.ne.s32.totalorder %s74, %s90
      %p92 = scmp.eq.s32.totalorder %s19, 0
      %p93 = por %p91, %p92
      %s95 = sadd.s32 %s94, 1
      %p98 = scmp.eq.s32.totalorder %s13, 3
      %p99 = scmp.ne.s32.totalorder %s94, %s96
      %p100 = scmp.eq.s32.totalorder %s13, 0
      %p101 = por %p99, %p100
      %p102 = scmp.ne.s32.totalorder %s94, %s96
      %p103 = scmp.eq.s32.totalorder %s18, 3
      %p104 = por %p102, %p103
      %p105 = scmp.ne.s32.totalorder %s96, %s97
      %p106 = scmp.eq.s32.totalorder %s18, 0
      %p107 = por %p105, %p106
      %p108 = scmp.ne.s32.totalorder %s96, %s97
      %p109 = scmp.eq.s32.totalorder %s19, 3
      %p110 = por %p108, %p109
      %p112 = scmp.ne.s32.totalorder %s97, %s111
      %p113 = scmp.eq.s32.totalorder %s19, 0
      %p114 = por %p112, %p113
      %p115 = scmp.le.s32.totalorder 1, %s13
      %p116 = scmp.lt.s32.totalorder %s13, 5
      %p117 = pnand %p115, %p116
      %p118 = pneg %p117
      // Predicated region
      $region9: #{branch_forward.3} parent=5 // pred_check
        _
      $region10: #{branch_forward.3} parent=5 // pred_check_branch
        %120 = sbr.rel (%p117) target = $region12
      $region11: #{branch_forward.3} parent=5 // pred_region
        %s121 = ssub.s32 %s13, 1
        // Predicated region
        $region13: #{branch_forward.3} parent=11 // pred_check
          %p122 = pneg %p60
        $region14: #{branch_forward.3} parent=11 // pred_check_branch
          %124 = sbr.rel (%p122) target = $region16
        $region15: #{branch_forward.3} parent=11 // pred_region
          _
        $region16: #{branch_forward.3} parent=11 // pred_fallthru
          _
      $region12: #{branch_forward.3} parent=5 // pred_fallthru
        _
      %p125 = scmp.lt.s32.totalorder %s13, 4
      // Predicated region
      $region17: #{branch_forward.3} parent=5 // pred_check
        %p126 = pneg %p125
      $region18: #{branch_forward.3} parent=5 // pred_check_branch
        %128 = sbr.rel (%p126) target = $region20
      $region19: #{branch_forward.3} parent=5 // pred_region
        // Predicated region
        $region21: #{branch_forward.3} parent=19 // pred_check
          %p129 = pneg %p33
        $region22: #{branch_forward.3} parent=19 // pred_check_branch
          %131 = sbr.rel (%p129) target = $region24
        $region23: #{branch_forward.3} parent=19 // pred_region
          %s132 = sand.u32 %s23, 1
          %s133 = scalar_lea.sflag [#allocation3], %s132
          %s134 = sand.u32 %s23, 1
          %s135 = smul.addr %s134, 512
          %s136 = scalar_lea.vmem [#allocation2], %s135
          %s137 = smul.u32 16, %s13
          %s139 = ssub.s32 8192, 8192
          %140 = vsyncadd %s133, %s139
          %s141 = smul.addr %s137, 4
          %s142 = smul.addr %s141, 128
          %s143 = scalar_lea.hbm %s0, %s142
          %s144 = sshll.u32 %s136, 4
          %s145 = int_to_ptr.vmem [resolvable:$true] %s144
          %150 = dma.hbm_to_vmem [thread:$0]  %s143, 8192, %s145, %s133, 512, 512, 32
        $region24: #{branch_forward.3} parent=19 // pred_fallthru
          _
      $region20: #{branch_forward.3} parent=5 // pred_fallthru
        _
      %p151 = scmp.le.s32.totalorder 1, %s13
      %p152 = scmp.lt.s32.totalorder %s13, 5
      %p153 = pnand %p151, %p152
      %p154 = pneg %p153
      // Predicated region
      $region25: #{branch_forward.3} parent=5 // pred_check
        _
      $region26: #{branch_forward.3} parent=5 // pred_check_branch
        %156 = sbr.rel (%p153) target = $region28
      $region27: #{branch_forward.3} parent=5 // pred_region
        %s157 = ssub.s32 %s13, 1
        %s158 = sand.u32 %s26, 1
        %s159 = scalar_lea.sflag [#allocation3], %s158
        %s160 = sand.u32 %s26, 1
        %s161 = smul.addr %s160, 512
        %s162 = scalar_lea.vmem [#allocation2], %s161
        // Predicated region
        $region29: #{branch_forward.3} parent=27 // pred_check
          %p163 = pneg %p39
        $region30: #{branch_forward.3} parent=27 // pred_check_branch
          %165 = sbr.rel (%p163) target = $region32
        $region31: #{branch_forward.3} parent=27 // pred_region
          %166 = dma.done %s159, 8192
        $region32: #{branch_forward.3} parent=27 // pred_fallthru
          _
        %s167 = sand.u32 %s26, 1
        %s168 = scalar_lea.sflag [#allocation3], %s167
        %s169 = sand.u32 %s26, 1
        %s170 = smul.addr %s169, 512
        %s171 = scalar_lea.vmem [#allocation2], %s170
        %p172 = pneg %p39
        %p173 = pneg %p36
        %p174 = pneg %p60
        %p175 = pneg %p57
        %p176 = pneg %p86
        %p177 = pneg %p83
        %s178 = smul.u32 16, %s18
        %p179 = scmp.lt.s32.totalorder %s178, 63
        %s180 = scalar_select %p179, %s178, 63
        %s181 = smul.addr %s180, 2
        %s182 = smul.addr %s181, 4
        %s183 = scalar_lea.vmem %s2, %s182
        %p184 = pneg %p107
        %p185 = pneg %p104
        %s186 = smul.u32 16, %s18
        %s187 = smul.u32 16, %s18
        %p188 = scmp.lt.s32.totalorder %s187, 63
        %s189 = scalar_select %p188, %s187, 63
        %s190 = smul.addr %s189, 2
        %s191 = smul.addr %s190, 4
        %s192 = scalar_lea.vmem %s2, %s191
        %s193 = smul.u32 16, %s18
        %p194 = scmp.eq.s32.totalorder %s18, 0
        // Predicated region
        $region33: #{branch_forward.3} parent=27 // pred_check
          %p195 = pneg %p194
        $region34: #{branch_forward.3} parent=27 // pred_check_branch
          %197 = sbr.rel (%p195) target = $region36
        $region35: #{branch_forward.3} parent=27 // pred_region
          %198 = vst [vmem:[%s3] sm:$0xf] 0.0
        $region36: #{branch_forward.3} parent=27 // pred_fallthru
          _
        %v199 = vld [vmem:[%s162] sm:$0xff]
        %v200 = vld [vmem:[%s162 + $0x8] sm:$0xff]
        %v201 = vld [vmem:[%s162 + $0x10] sm:$0xff]
        %v202 = vld [vmem:[%s162 + $0x18] sm:$0xff]
        %v203 = vld [vmem:[%s162 + $0x20] sm:$0xff]
        %v204 = vld [vmem:[%s162 + $0x28] sm:$0xff]
        %v205 = vld [vmem:[%s162 + $0x30] sm:$0xff]
        %v206 = vld [vmem:[%s162 + $0x38] sm:$0xff]
        %v207 = vld [vmem:[%s162 + $0x40] sm:$0xff]
        %v208 = vld [vmem:[%s162 + $0x48] sm:$0xff]
        %v209 = vld [vmem:[%s162 + $0x50] sm:$0xff]
        %v210 = vld [vmem:[%s162 + $0x58] sm:$0xff]
        %v211 = vld [vmem:[%s162 + $0x60] sm:$0xff]
        %v212 = vld [vmem:[%s162 + $0x68] sm:$0xff]
        %v213 = vld [vmem:[%s162 + $0x70] sm:$0xff]
        %v214 = vld [vmem:[%s162 + $0x78] sm:$0xff]
        %v215 = vld [vmem:[%s162 + $0x80] sm:$0xff]
        %v216 = vld [vmem:[%s162 + $0x88] sm:$0xff]
        %v217 = vld [vmem:[%s162 + $0x90] sm:$0xff]
        %v218 = vld [vmem:[%s162 + $0x98] sm:$0xff]
        %v219 = vld [vmem:[%s162 + $0xa0] sm:$0xff]
        %v220 = vld [vmem:[%s162 + $0xa8] sm:$0xff]
        %v221 = vld [vmem:[%s162 + $0xb0] sm:$0xff]
        %v222 = vld [vmem:[%s162 + $0xb8] sm:$0xff]
        %v223 = vld [vmem:[%s162 + $0xc0] sm:$0xff]
        %v224 = vld [vmem:[%s162 + $0xc8] sm:$0xff]
        %v225 = vld [vmem:[%s162 + $0xd0] sm:$0xff]
        %v226 = vld [vmem:[%s162 + $0xd8] sm:$0xff]
        %v227 = vld [vmem:[%s162 + $0xe0] sm:$0xff]
        %v228 = vld [vmem:[%s162 + $0xe8] sm:$0xff]
        %v229 = vld [vmem:[%s162 + $0xf0] sm:$0xff]
        %v230 = vld [vmem:[%s162 + $0xf8] sm:$0xff]
        %v231 = vld [vmem:[%s162 + $0x100] sm:$0xff]
        %v232 = vld [vmem:[%s162 + $0x108] sm:$0xff]
        %v233 = vld [vmem:[%s162 + $0x110] sm:$0xff]
        %v234 = vld [vmem:[%s162 + $0x118] sm:$0xff]
        %v235 = vld [vmem:[%s162 + $0x120] sm:$0xff]
        %v236 = vld [vmem:[%s162 + $0x128] sm:$0xff]
        %v237 = vld [vmem:[%s162 + $0x130] sm:$0xff]
        %v238 = vld [vmem:[%s162 + $0x138] sm:$0xff]
        %v239 = vld [vmem:[%s162 + $0x140] sm:$0xff]
        %v240 = vld [vmem:[%s162 + $0x148] sm:$0xff]
        %v241 = vld [vmem:[%s162 + $0x150] sm:$0xff]
        %v242 = vld [vmem:[%s162 + $0x158] sm:$0xff]
        %v243 = vld [vmem:[%s162 + $0x160] sm:$0xff]
        %v244 = vld [vmem:[%s162 + $0x168] sm:$0xff]
        %v245 = vld [vmem:[%s162 + $0x170] sm:$0xff]
        %v246 = vld [vmem:[%s162 + $0x178] sm:$0xff]
        %v247 = vld [vmem:[%s162 + $0x180] sm:$0xff]
        %v248 = vld [vmem:[%s162 + $0x188] sm:$0xff]
        %v249 = vld [vmem:[%s162 + $0x190] sm:$0xff]
        %v250 = vld [vmem:[%s162 + $0x198] sm:$0xff]
        %v251 = vld [vmem:[%s162 + $0x1a0] sm:$0xff]
        %v252 = vld [vmem:[%s162 + $0x1a8] sm:$0xff]
        %v253 = vld [vmem:[%s162 + $0x1b0] sm:$0xff]
        %v254 = vld [vmem:[%s162 + $0x1b8] sm:$0xff]
        %v255 = vld [vmem:[%s162 + $0x1c0] sm:$0xff]
        %v256 = vld [vmem:[%s162 + $0x1c8] sm:$0xff]
        %v257 = vld [vmem:[%s162 + $0x1d0] sm:$0xff]
        %v258 = vld [vmem:[%s162 + $0x1d8] sm:$0xff]
        %v259 = vld [vmem:[%s162 + $0x1e0] sm:$0xff]
        %v260 = vld [vmem:[%s162 + $0x1e8] sm:$0xff]
        %v261 = vld [vmem:[%s162 + $0x1f0] sm:$0xff]
        %v262 = vld [vmem:[%s162 + $0x1f8] sm:$0xff]
        %v263 = vpack.c.bf16 %v203, %v199
        %v264 = vpack.c.bf16 %v204, %v200
        %v265 = vpack.c.bf16 %v205, %v201
        %v266 = vpack.c.bf16 %v206, %v202
        %v267 = vpack.c.bf16 %v211, %v207
        %v268 = vpack.c.bf16 %v212, %v208
        %v269 = vpack.c.bf16 %v213, %v209
        %v270 = vpack.c.bf16 %v214, %v210
        %v271 = vpack.c.bf16 %v219, %v215
        %v272 = vpack.c.bf16 %v220, %v216
        %v273 = vpack.c.bf16 %v221, %v217
        %v274 = vpack.c.bf16 %v222, %v218
        %v275 = vpack.c.bf16 %v227, %v223
        %v276 = vpack.c.bf16 %v228, %v224
        %v277 = vpack.c.bf16 %v229, %v225
        %v278 = vpack.c.bf16 %v230, %v226
        %v279 = vpack.c.bf16 %v235, %v231
        %v280 = vpack.c.bf16 %v236, %v232
        %v281 = vpack.c.bf16 %v237, %v233
        %v282 = vpack.c.bf16 %v238, %v234
        %v283 = vpack.c.bf16 %v243, %v239
        %v284 = vpack.c.bf16 %v244, %v240
        %v285 = vpack.c.bf16 %v245, %v241
        %v286 = vpack.c.bf16 %v246, %v242
        %v287 = vpack.c.bf16 %v251, %v247
        %v288 = vpack.c.bf16 %v252, %v248
        %v289 = vpack.c.bf16 %v253, %v249
        %v290 = vpack.c.bf16 %v254, %v250
        %v291 = vpack.c.bf16 %v259, %v255
        %v292 = vpack.c.bf16 %v260, %v256
        %v293 = vpack.c.bf16 %v261, %v257
        %v294 = vpack.c.bf16 %v262, %v258
        %v295 = vld [vmem:[%s1] sm:$0xff]
        %v296 = vld [vmem:[%s1 + $0x8] sm:$0xff]
        %v297 = vld [vmem:[%s1 + $0x10] sm:$0xff]
        %v298 = vld [vmem:[%s1 + $0x18] sm:$0xff]
        %v299 = vld [vmem:[%s1 + $0x20] sm:$0xff]
        %v300 = vld [vmem:[%s1 + $0x28] sm:$0xff]
        %v301 = vld [vmem:[%s1 + $0x30] sm:$0xff]
        %v302 = vld [vmem:[%s1 + $0x38] sm:$0xff]
        %v303 = vld [vmem:[%s1 + $0x40] sm:$0xff]
        %v304 = vld [vmem:[%s1 + $0x48] sm:$0xff]
        %v305 = vld [vmem:[%s1 + $0x50] sm:$0xff]
        %v306 = vld [vmem:[%s1 + $0x58] sm:$0xff]
        %v307 = vld [vmem:[%s1 + $0x60] sm:$0xff]
        %v308 = vld [vmem:[%s1 + $0x68] sm:$0xff]
        %v309 = vld [vmem:[%s1 + $0x70] sm:$0xff]
        %v310 = vld [vmem:[%s1 + $0x78] sm:$0xff]
        %v311 = vld [vmem:[%s1 + $0x80] sm:$0xff]
        %v312 = vld [vmem:[%s1 + $0x88] sm:$0xff]
        %v313 = vld [vmem:[%s1 + $0x90] sm:$0xff]
        %v314 = vld [vmem:[%s1 + $0x98] sm:$0xff]
        %v315 = vld [vmem:[%s1 + $0xa0] sm:$0xff]
        %v316 = vld [vmem:[%s1 + $0xa8] sm:$0xff]
        %v317 = vld [vmem:[%s1 + $0xb0] sm:$0xff]
        %v318 = vld [vmem:[%s1 + $0xb8] sm:$0xff]
        %v319 = vld [vmem:[%s1 + $0xc0] sm:$0xff]
        %v320 = vld [vmem:[%s1 + $0xc8] sm:$0xff]
        %v321 = vld [vmem:[%s1 + $0xd0] sm:$0xff]
        %v322 = vld [vmem:[%s1 + $0xd8] sm:$0xff]
        %v323 = vld [vmem:[%s1 + $0xe0] sm:$0xff]
        %v324 = vld [vmem:[%s1 + $0xe8] sm:$0xff]
        %v325 = vld [vmem:[%s1 + $0xf0] sm:$0xff]
        %v326 = vld [vmem:[%s1 + $0xf8] sm:$0xff]
        %v327 = vld [vmem:[%s1 + $0x100] sm:$0xff]
        %v328 = vld [vmem:[%s1 + $0x108] sm:$0xff]
        %v329 = vld [vmem:[%s1 + $0x110] sm:$0xff]
        %v330 = vld [vmem:[%s1 + $0x118] sm:$0xff]
        %v331 = vld [vmem:[%s1 + $0x120] sm:$0xff]
        %v332 = vld [vmem:[%s1 + $0x128] sm:$0xff]
        %v333 = vld [vmem:[%s1 + $0x130] sm:$0xff]
        %v334 = vld [vmem:[%s1 + $0x138] sm:$0xff]
        %v335 = vld [vmem:[%s1 + $0x140] sm:$0xff]
        %v336 = vld [vmem:[%s1 + $0x148] sm:$0xff]
        %v337 = vld [vmem:[%s1 + $0x150] sm:$0xff]
        %v338 = vld [vmem:[%s1 + $0x158] sm:$0xff]
        %v339 = vld [vmem:[%s1 + $0x160] sm:$0xff]
        %v340 = vld [vmem:[%s1 + $0x168] sm:$0xff]
        %v341 = vld [vmem:[%s1 + $0x170] sm:$0xff]
        %v342 = vld [vmem:[%s1 + $0x178] sm:$0xff]
        %v343 = vld [vmem:[%s1 + $0x180] sm:$0xff]
        %v344 = vld [vmem:[%s1 + $0x188] sm:$0xff]
        %v345 = vld [vmem:[%s1 + $0x190] sm:$0xff]
        %v346 = vld [vmem:[%s1 + $0x198] sm:$0xff]
        %v347 = vld [vmem:[%s1 + $0x1a0] sm:$0xff]
        %v348 = vld [vmem:[%s1 + $0x1a8] sm:$0xff]
        %v349 = vld [vmem:[%s1 + $0x1b0] sm:$0xff]
        %v350 = vld [vmem:[%s1 + $0x1b8] sm:$0xff]
        %v351 = vld [vmem:[%s1 + $0x1c0] sm:$0xff]
        %v352 = vld [vmem:[%s1 + $0x1c8] sm:$0xff]
        %v353 = vld [vmem:[%s1 + $0x1d0] sm:$0xff]
        %v354 = vld [vmem:[%s1 + $0x1d8] sm:$0xff]
        %v355 = vld [vmem:[%s1 + $0x1e0] sm:$0xff]
        %v356 = vld [vmem:[%s1 + $0x1e8] sm:$0xff]
        %v357 = vld [vmem:[%s1 + $0x1f0] sm:$0xff]
        %v358 = vld [vmem:[%s1 + $0x1f8] sm:$0xff]
        %v423 = vunpack.c.l.b16 %v295
        %v424 = vunpack.c.h.b16 %v295
        %v425 = vunpack.c.l.b16 %v296
        %v426 = vunpack.c.h.b16 %v296
        %v427 = vunpack.c.l.b16 %v297
        %v428 = vunpack.c.h.b16 %v297
        %v429 = vunpack.c.l.b16 %v298
        %v430 = vunpack.c.h.b16 %v298
        %v431 = vunpack.c.l.b16 %v299
        %v432 = vunpack.c.h.b16 %v299
        %v433 = vunpack.c.l.b16 %v300
        %v434 = vunpack.c.h.b16 %v300
        %v435 = vunpack.c.l.b16 %v301
        %v436 = vunpack.c.h.b16 %v301
        %v437 = vunpack.c.l.b16 %v302
        %v438 = vunpack.c.h.b16 %v302
        %v439 = vunpack.c.l.b16 %v303
        %v440 = vunpack.c.h.b16 %v303
        %v441 = vunpack.c.l.b16 %v304
        %v442 = vunpack.c.h.b16 %v304
        %v443 = vunpack.c.l.b16 %v305
        %v444 = vunpack.c.h.b16 %v305
        %v445 = vunpack.c.l.b16 %v306
        %v446 = vunpack.c.h.b16 %v306
        %v447 = vunpack.c.l.b16 %v307
        %v448 = vunpack.c.h.b16 %v307
        %v449 = vunpack.c.l.b16 %v308
        %v450 = vunpack.c.h.b16 %v308
        %v451 = vunpack.c.l.b16 %v309
        %v452 = vunpack.c.h.b16 %v309
        %v453 = vunpack.c.l.b16 %v310
        %v454 = vunpack.c.h.b16 %v310
        %v455 = vunpack.c.l.b16 %v311
        %v456 = vunpack.c.h.b16 %v311
        %v457 = vunpack.c.l.b16 %v312
        %v458 = vunpack.c.h.b16 %v312
        %v459 = vunpack.c.l.b16 %v313
        %v460 = vunpack.c.h.b16 %v313
        %v461 = vunpack.c.l.b16 %v314
        %v462 = vunpack.c.h.b16 %v314
        %v463 = vunpack.c.l.b16 %v315
        %v464 = vunpack.c.h.b16 %v315
        %v465 = vunpack.c.l.b16 %v316
        %v466 = vunpack.c.h.b16 %v316
        %v467 = vunpack.c.l.b16 %v317
        %v468 = vunpack.c.h.b16 %v317
        %v469 = vunpack.c.l.b16 %v318
        %v470 = vunpack.c.h.b16 %v318
        %v471 = vunpack.c.l.b16 %v319
        %v472 = vunpack.c.h.b16 %v319
        %v473 = vunpack.c.l.b16 %v320
        %v474 = vunpack.c.h.b16 %v320
        %v475 = vunpack.c.l.b16 %v321
        %v476 = vunpack.c.h.b16 %v321
        %v477 = vunpack.c.l.b16 %v322
        %v478 = vunpack.c.h.b16 %v322
        %v479 = vunpack.c.l.b16 %v323
        %v480 = vunpack.c.h.b16 %v323
        %v481 = vunpack.c.l.b16 %v324
        %v482 = vunpack.c.h.b16 %v324
        %v483 = vunpack.c.l.b16 %v325
        %v484 = vunpack.c.h.b16 %v325
        %v485 = vunpack.c.l.b16 %v326
        %v486 = vunpack.c.h.b16 %v326
        %v487 = vunpack.c.l.b16 %v327
        %v488 = vunpack.c.h.b16 %v327
        %v489 = vunpack.c.l.b16 %v328
        %v490 = vunpack.c.h.b16 %v328
        %v491 = vunpack.c.l.b16 %v329
        %v492 = vunpack.c.h.b16 %v329
        %v493 = vunpack.c.l.b16 %v330
        %v494 = vunpack.c.h.b16 %v330
        %v495 = vunpack.c.l.b16 %v331
        %v496 = vunpack.c.h.b16 %v331
        %v497 = vunpack.c.l.b16 %v332
        %v498 = vunpack.c.h.b16 %v332
        %v499 = vunpack.c.l.b16 %v333
        %v500 = vunpack.c.h.b16 %v333
        %v501 = vunpack.c.l.b16 %v334
        %v502 = vunpack.c.h.b16 %v334
        %v503 = vunpack.c.l.b16 %v335
        %v504 = vunpack.c.h.b16 %v335
        %v505 = vunpack.c.l.b16 %v336
        %v506 = vunpack.c.h.b16 %v336
        %v507 = vunpack.c.l.b16 %v337
        %v508 = vunpack.c.h.b16 %v337
        %v509 = vunpack.c.l.b16 %v338
        %v510 = vunpack.c.h.b16 %v338
        %v511 = vunpack.c.l.b16 %v339
        %v512 = vunpack.c.h.b16 %v339
        %v513 = vunpack.c.l.b16 %v340
        %v514 = vunpack.c.h.b16 %v340
        %v515 = vunpack.c.l.b16 %v341
        %v516 = vunpack.c.h.b16 %v341
        %v517 = vunpack.c.l.b16 %v342
        %v518 = vunpack.c.h.b16 %v342
        %v519 = vunpack.c.l.b16 %v343
        %v520 = vunpack.c.h.b16 %v343
        %v521 = vunpack.c.l.b16 %v344
        %v522 = vunpack.c.h.b16 %v344
        %v523 = vunpack.c.l.b16 %v345
        %v524 = vunpack.c.h.b16 %v345
        %v525 = vunpack.c.l.b16 %v346
        %v526 = vunpack.c.h.b16 %v346
        %v527 = vunpack.c.l.b16 %v347
        %v528 = vunpack.c.h.b16 %v347
        %v529 = vunpack.c.l.b16 %v348
        %v530 = vunpack.c.h.b16 %v348
        %v531 = vunpack.c.l.b16 %v349
        %v532 = vunpack.c.h.b16 %v349
        %v533 = vunpack.c.l.b16 %v350
        %v534 = vunpack.c.h.b16 %v350
        %v535 = vunpack.c.l.b16 %v351
        %v536 = vunpack.c.h.b16 %v351
        %v537 = vunpack.c.l.b16 %v352
        %v538 = vunpack.c.h.b16 %v352
        %v539 = vunpack.c.l.b16 %v353
        %v540 = vunpack.c.h.b16 %v353
        %v541 = vunpack.c.l.b16 %v354
        %v542 = vunpack.c.h.b16 %v354
        %v543 = vunpack.c.l.b16 %v355
        %v544 = vunpack.c.h.b16 %v355
        %v545 = vunpack.c.l.b16 %v356
        %v546 = vunpack.c.h.b16 %v356
        %v547 = vunpack.c.l.b16 %v357
        %v548 = vunpack.c.h.b16 %v357
        %v549 = vunpack.c.l.b16 %v358
        %v550 = vunpack.c.h.b16 %v358
        %v551 = vpack.c.b16 %v425, %v423
        %v552 = vpack.c.b16 %v426, %v424
        %v553 = vpack.c.b16 %v429, %v427
        %v554 = vpack.c.b16 %v430, %v428
        %v555 = vpack.c.b16 %v433, %v431
        %v556 = vpack.c.b16 %v434, %v432
        %v557 = vpack.c.b16 %v437, %v435
        %v558 = vpack.c.b16 %v438, %v436
        %v559 = vpack.c.b16 %v441, %v439
        %v560 = vpack.c.b16 %v442, %v440
        %v561 = vpack.c.b16 %v445, %v443
        %v562 = vpack.c.b16 %v446, %v444
        %v563 = vpack.c.b16 %v449, %v447
        %v564 = vpack.c.b16 %v450, %v448
        %v565 = vpack.c.b16 %v453, %v451
        %v566 = vpack.c.b16 %v454, %v452
        %v567 = vpack.c.b16 %v457, %v455
        %v568 = vpack.c.b16 %v458, %v456
        %v569 = vpack.c.b16 %v461, %v459
        %v570 = vpack.c.b16 %v462, %v460
        %v571 = vpack.c.b16 %v465, %v463
        %v572 = vpack.c.b16 %v466, %v464
        %v573 = vpack.c.b16 %v469, %v467
        %v574 = vpack.c.b16 %v470, %v468
        %v575 = vpack.c.b16 %v473, %v471
        %v576 = vpack.c.b16 %v474, %v472
        %v577 = vpack.c.b16 %v477, %v475
        %v578 = vpack.c.b16 %v478, %v476
        %v579 = vpack.c.b16 %v481, %v479
        %v580 = vpack.c.b16 %v482, %v480
        %v581 = vpack.c.b16 %v485, %v483
        %v582 = vpack.c.b16 %v486, %v484
        %v583 = vpack.c.b16 %v489, %v487
        %v584 = vpack.c.b16 %v490, %v488
        %v585 = vpack.c.b16 %v493, %v491
        %v586 = vpack.c.b16 %v494, %v492
        %v587 = vpack.c.b16 %v497, %v495
        %v588 = vpack.c.b16 %v498, %v496
        %v589 = vpack.c.b16 %v501, %v499
        %v590 = vpack.c.b16 %v502, %v500
        %v591 = vpack.c.b16 %v505, %v503
        %v592 = vpack.c.b16 %v506, %v504
        %v593 = vpack.c.b16 %v509, %v507
        %v594 = vpack.c.b16 %v510, %v508
        %v595 = vpack.c.b16 %v513, %v511
        %v596 = vpack.c.b16 %v514, %v512
        %v597 = vpack.c.b16 %v517, %v515
        %v598 = vpack.c.b16 %v518, %v516
        %v599 = vpack.c.b16 %v521, %v519
        %v600 = vpack.c.b16 %v522, %v520
        %v601 = vpack.c.b16 %v525, %v523
        %v602 = vpack.c.b16 %v526, %v524
        %v603 = vpack.c.b16 %v529, %v527
        %v604 = vpack.c.b16 %v530, %v528
        %v605 = vpack.c.b16 %v533, %v531
        %v606 = vpack.c.b16 %v534, %v532
        %v607 = vpack.c.b16 %v537, %v535
        %v608 = vpack.c.b16 %v538, %v536
        %v609 = vpack.c.b16 %v541, %v539
        %v610 = vpack.c.b16 %v542, %v540
        %v611 = vpack.c.b16 %v545, %v543
        %v612 = vpack.c.b16 %v546, %v544
        %v613 = vpack.c.b16 %v549, %v547
        %v614 = vpack.c.b16 %v550, %v548
        %679 = vmatprep.subr.bf16.mxu0 %v566
        %680 = vmatpush1.bf16.msra.mxu0 %v565
        %681 = vmatprep.subr.bf16.mxu0 %v564
        %682 = vmatpush1.bf16.msra.mxu0 %v563
        %683 = vmatprep.subr.bf16.mxu0 %v562
        %684 = vmatpush1.bf16.msra.mxu0 %v561
        %685 = vmatprep.subr.bf16.mxu0 %v560
        %686 = vmatpush1.bf16.msra.mxu0 %v559
        %687 = vmatprep.subr.bf16.mxu0 %v558
        %688 = vmatpush1.bf16.msra.mxu0 %v557
        %689 = vmatprep.subr.bf16.mxu0 %v556
        %690 = vmatpush1.bf16.msra.mxu0 %v555
        %691 = vmatprep.subr.bf16.mxu0 %v554
        %692 = vmatpush1.bf16.msra.mxu0 %v553
        %693 = vmatprep.subr.bf16.mxu0 %v552
        %694 = vmatpush1.bf16.msra.mxu0 %v551
        %695 = vmatprep.subr.bf16.mxu0 %v582
        %696 = vmatpush2.bf16.msra.mxu0 %v581
        %697 = vmatprep.subr.bf16.mxu0 %v580
        %698 = vmatpush2.bf16.msra.mxu0 %v579
        %699 = vmatprep.subr.bf16.mxu0 %v578
        %700 = vmatpush2.bf16.msra.mxu0 %v577
        %701 = vmatprep.subr.bf16.mxu0 %v576
        %702 = vmatpush2.bf16.msra.mxu0 %v575
        %703 = vmatprep.subr.bf16.mxu0 %v574
        %704 = vmatpush2.bf16.msra.mxu0 %v573
        %705 = vmatprep.subr.bf16.mxu0 %v572
        %706 = vmatpush2.bf16.msra.mxu0 %v571
        %707 = vmatprep.subr.bf16.mxu0 %v570
        %708 = vmatpush2.bf16.msra.mxu0 %v569
        %709 = vmatprep.subr.bf16.mxu0 %v568
        %710 = vmatpush2.bf16.msra.mxu0 %v567
        %711 = vmatprep.mubr.bf16.mxu0 %v264
        %712 = vmatmul.mubr.bf16.gmra.mxu0 %v263
        %v713 = vpop.f32.mrf.mxu0
        %v714 = vadd.f32 0.0, %v713
        %v715 = vpop.f32.mrf.mxu0
        %v716 = vadd.f32 0.0, %v715
        %v717 = vpop.f32.mrf.mxu0
        %v718 = vadd.f32 0.0, %v717
        %v719 = vpop.f32.mrf.mxu0
        %v720 = vadd.f32 0.0, %v719
        %721 = vmatprep.mubr.bf16.mxu0 %v268
        %722 = vmatmul.mubr.bf16.gmra.mxu0 %v267
        %v723 = vpop.f32.mrf.mxu0
        %v724 = vadd.f32 0.0, %v723
        %v725 = vpop.f32.mrf.mxu0
        %v726 = vadd.f32 0.0, %v725
        %v727 = vpop.f32.mrf.mxu0
        %v728 = vadd.f32 0.0, %v727
        %v729 = vpop.f32.mrf.mxu0
        %v730 = vadd.f32 0.0, %v729
        %731 = vmatprep.mubr.bf16.mxu0 %v272
        %732 = vmatmul.mubr.bf16.gmra.mxu0 %v271
        %v733 = vpop.f32.mrf.mxu0
        %v734 = vadd.f32 0.0, %v733
        %v735 = vpop.f32.mrf.mxu0
        %v736 = vadd.f32 0.0, %v735
        %v737 = vpop.f32.mrf.mxu0
        %v738 = vadd.f32 0.0, %v737
        %v739 = vpop.f32.mrf.mxu0
        %v740 = vadd.f32 0.0, %v739
        %741 = vmatprep.mubr.bf16.mxu0 %v276
        %742 = vmatmul.mubr.bf16.gmra.mxu0 %v275
        %v743 = vpop.f32.mrf.mxu0
        %v744 = vadd.f32 0.0, %v743
        %v745 = vpop.f32.mrf.mxu0
        %v746 = vadd.f32 0.0, %v745
        %v747 = vpop.f32.mrf.mxu0
        %v748 = vadd.f32 0.0, %v747
        %v749 = vpop.f32.mrf.mxu0
        %v750 = vadd.f32 0.0, %v749
        %751 = vmatprep.mubr.bf16.mxu0 %v280
        %752 = vmatmul.mubr.bf16.gmra.mxu0 %v279
        %v753 = vpop.f32.mrf.mxu0
        %v754 = vadd.f32 0.0, %v753
        %v755 = vpop.f32.mrf.mxu0
        %v756 = vadd.f32 0.0, %v755
        %v757 = vpop.f32.mrf.mxu0
        %v758 = vadd.f32 0.0, %v757
        %v759 = vpop.f32.mrf.mxu0
        %v760 = vadd.f32 0.0, %v759
        %761 = vmatprep.mubr.bf16.mxu0 %v284
        %762 = vmatmul.mubr.bf16.gmra.mxu0 %v283
        %v763 = vpop.f32.mrf.mxu0
        %v764 = vadd.f32 0.0, %v763
        %v765 = vpop.f32.mrf.mxu0
        %v766 = vadd.f32 0.0, %v765
        %v767 = vpop.f32.mrf.mxu0
        %v768 = vadd.f32 0.0, %v767
        %v769 = vpop.f32.mrf.mxu0
        %v770 = vadd.f32 0.0, %v769
        %771 = vmatprep.mubr.bf16.mxu0 %v288
        %772 = vmatmul.mubr.bf16.gmra.mxu0 %v287
        %v773 = vpop.f32.mrf.mxu0
        %v774 = vadd.f32 0.0, %v773
        %v775 = vpop.f32.mrf.mxu0
        %v776 = vadd.f32 0.0, %v775
        %v777 = vpop.f32.mrf.mxu0
        %v778 = vadd.f32 0.0, %v777
        %v779 = vpop.f32.mrf.mxu0
        %v780 = vadd.f32 0.0, %v779
        %781 = vmatprep.mubr.bf16.mxu0 %v292
        %782 = vmatmul.mubr.bf16.gmra.mxu0 %v291
        %v783 = vpop.f32.mrf.mxu0
        %v784 = vadd.f32 0.0, %v783
        %v785 = vpop.f32.mrf.mxu0
        %v786 = vadd.f32 0.0, %v785
        %v787 = vpop.f32.mrf.mxu0
        %v788 = vadd.f32 0.0, %v787
        %v789 = vpop.f32.mrf.mxu0
        %v790 = vadd.f32 0.0, %v789
        %791 = vdwg.mxu0
        %792 = vmatprep.subr.bf16.mxu0 %v598
        %793 = vmatpush1.bf16.msra.mxu0 %v597
        %794 = vmatprep.subr.bf16.mxu0 %v596
        %795 = vmatpush1.bf16.msra.mxu0 %v595
        %796 = vmatprep.subr.bf16.mxu0 %v594
        %797 = vmatpush1.bf16.msra.mxu0 %v593
        %798 = vmatprep.subr.bf16.mxu0 %v592
        %799 = vmatpush1.bf16.msra.mxu0 %v591
        %800 = vmatprep.subr.bf16.mxu0 %v590
        %801 = vmatpush1.bf16.msra.mxu0 %v589
        %802 = vmatprep.subr.bf16.mxu0 %v588
        %803 = vmatpush1.bf16.msra.mxu0 %v587
        %804 = vmatprep.subr.bf16.mxu0 %v586
        %805 = vmatpush1.bf16.msra.mxu0 %v585
        %806 = vmatprep.subr.bf16.mxu0 %v584
        %807 = vmatpush1.bf16.msra.mxu0 %v583
        %808 = vmatprep.subr.bf16.mxu0 %v614
        %809 = vmatpush2.bf16.msra.mxu0 %v613
        %810 = vmatprep.subr.bf16.mxu0 %v612
        %811 = vmatpush2.bf16.msra.mxu0 %v611
        %812 = vmatprep.subr.bf16.mxu0 %v610
        %813 = vmatpush2.bf16.msra.mxu0 %v609
        %814 = vmatprep.subr.bf16.mxu0 %v608
        %815 = vmatpush2.bf16.msra.mxu0 %v607
        %816 = vmatprep.subr.bf16.mxu0 %v606
        %817 = vmatpush2.bf16.msra.mxu0 %v605
        %818 = vmatprep.subr.bf16.mxu0 %v604
        %819 = vmatpush2.bf16.msra.mxu0 %v603
        %820 = vmatprep.subr.bf16.mxu0 %v602
        %821 = vmatpush2.bf16.msra.mxu0 %v601
        %822 = vmatprep.subr.bf16.mxu0 %v600
        %823 = vmatpush2.bf16.msra.mxu0 %v599
        %824 = vmatprep.mubr.bf16.mxu0 %v266
        %825 = vmatmul.mubr.bf16.gmra.mxu0 %v265
        %v826 = vpop.f32.mrf.mxu0
        %v827 = vadd.f32 %v714, %v826
        %v828 = vpop.f32.mrf.mxu0
        %v829 = vadd.f32 %v716, %v828
        %v830 = vpop.f32.mrf.mxu0
        %v831 = vadd.f32 %v718, %v830
        %v832 = vpop.f32.mrf.mxu0
        %v833 = vadd.f32 %v720, %v832
        %834 = vmatprep.mubr.bf16.mxu0 %v270
        %835 = vmatmul.mubr.bf16.gmra.mxu0 %v269
        %v836 = vpop.f32.mrf.mxu0
        %v837 = vadd.f32 %v724, %v836
        %v838 = vpop.f32.mrf.mxu0
        %v839 = vadd.f32 %v726, %v838
        %v840 = vpop.f32.mrf.mxu0
        %v841 = vadd.f32 %v728, %v840
        %v842 = vpop.f32.mrf.mxu0
        %v843 = vadd.f32 %v730, %v842
        %844 = vmatprep.mubr.bf16.mxu0 %v274
        %845 = vmatmul.mubr.bf16.gmra.mxu0 %v273
        %v846 = vpop.f32.mrf.mxu0
        %v847 = vadd.f32 %v734, %v846
        %v848 = vpop.f32.mrf.mxu0
        %v849 = vadd.f32 %v736, %v848
        %v850 = vpop.f32.mrf.mxu0
        %v851 = vadd.f32 %v738, %v850
        %v852 = vpop.f32.mrf.mxu0
        %v853 = vadd.f32 %v740, %v852
        %854 = vmatprep.mubr.bf16.mxu0 %v278
        %855 = vmatmul.mubr.bf16.gmra.mxu0 %v277
        %v856 = vpop.f32.mrf.mxu0
        %v857 = vadd.f32 %v744, %v856
        %v858 = vpop.f32.mrf.mxu0
        %v859 = vadd.f32 %v746, %v858
        %v860 = vpop.f32.mrf.mxu0
        %v861 = vadd.f32 %v748, %v860
        %v862 = vpop.f32.mrf.mxu0
        %v863 = vadd.f32 %v750, %v862
        %864 = vmatprep.mubr.bf16.mxu0 %v282
        %865 = vmatmul.mubr.bf16.gmra.mxu0 %v281
        %v866 = vpop.f32.mrf.mxu0
        %v867 = vadd.f32 %v754, %v866
        %v868 = vpop.f32.mrf.mxu0
        %v869 = vadd.f32 %v756, %v868
        %v870 = vpop.f32.mrf.mxu0
        %v871 = vadd.f32 %v758, %v870
        %v872 = vpop.f32.mrf.mxu0
        %v873 = vadd.f32 %v760, %v872
        %874 = vmatprep.mubr.bf16.mxu0 %v286
        %875 = vmatmul.mubr.bf16.gmra.mxu0 %v285
        %v876 = vpop.f32.mrf.mxu0
        %v877 = vadd.f32 %v764, %v876
        %v878 = vpop.f32.mrf.mxu0
        %v879 = vadd.f32 %v766, %v878
        %v880 = vpop.f32.mrf.mxu0
        %v881 = vadd.f32 %v768, %v880
        %v882 = vpop.f32.mrf.mxu0
        %v883 = vadd.f32 %v770, %v882
        %884 = vmatprep.mubr.bf16.mxu0 %v290
        %885 = vmatmul.mubr.bf16.gmra.mxu0 %v289
        %v886 = vpop.f32.mrf.mxu0
        %v887 = vadd.f32 %v774, %v886
        %v888 = vpop.f32.mrf.mxu0
        %v889 = vadd.f32 %v776, %v888
        %v890 = vpop.f32.mrf.mxu0
        %v891 = vadd.f32 %v778, %v890
        %v892 = vpop.f32.mrf.mxu0
        %v893 = vadd.f32 %v780, %v892
        %894 = vmatprep.mubr.bf16.mxu0 %v294
        %895 = vmatmul.mubr.bf16.gmra.mxu0 %v293
        %v896 = vpop.f32.mrf.mxu0
        %v897 = vadd.f32 %v784, %v896
        %v898 = vpop.f32.mrf.mxu0
        %v899 = vadd.f32 %v786, %v898
        %v900 = vpop.f32.mrf.mxu0
        %v901 = vadd.f32 %v788, %v900
        %v902 = vpop.f32.mrf.mxu0
        %v903 = vadd.f32 %v790, %v902
        %904 = vdwg.mxu0
        %v905 = vpack.c.bf16 %v831, %v827
        %v906 = vpack.c.bf16 %v833, %v829
        %v907 = vpack.c.bf16 %v841, %v837
        %v908 = vpack.c.bf16 %v843, %v839
        %v909 = vpack.c.bf16 %v851, %v847
        %v910 = vpack.c.bf16 %v853, %v849
        %v911 = vpack.c.bf16 %v861, %v857
        %v912 = vpack.c.bf16 %v863, %v859
        %v913 = vpack.c.bf16 %v871, %v867
        %v914 = vpack.c.bf16 %v873, %v869
        %v915 = vpack.c.bf16 %v881, %v877
        %v916 = vpack.c.bf16 %v883, %v879
        %v917 = vpack.c.bf16 %v891, %v887
        %v918 = vpack.c.bf16 %v893, %v889
        %v919 = vpack.c.bf16 %v901, %v897
        %v920 = vpack.c.bf16 %v903, %v899
        %v937 = vunpack.c.l.b16 %v905
        %v938 = vunpack.c.l.b16 %v906
        %v939 = vunpack.c.h.b16 %v905
        %v940 = vunpack.c.h.b16 %v906
        %v941 = vunpack.c.l.b16 %v907
        %v942 = vunpack.c.l.b16 %v908
        %v943 = vunpack.c.h.b16 %v907
        %v944 = vunpack.c.h.b16 %v908
        %v945 = vunpack.c.l.b16 %v909
        %v946 = vunpack.c.l.b16 %v910
        %v947 = vunpack.c.h.b16 %v909
        %v948 = vunpack.c.h.b16 %v910
        %v949 = vunpack.c.l.b16 %v911
        %v950 = vunpack.c.l.b16 %v912
        %v951 = vunpack.c.h.b16 %v911
        %v952 = vunpack.c.h.b16 %v912
        %v953 = vunpack.c.l.b16 %v913
        %v954 = vunpack.c.l.b16 %v914
        %v955 = vunpack.c.h.b16 %v913
        %v956 = vunpack.c.h.b16 %v914
        %v957 = vunpack.c.l.b16 %v915
        %v958 = vunpack.c.l.b16 %v916
        %v959 = vunpack.c.h.b16 %v915
        %v960 = vunpack.c.h.b16 %v916
        %v961 = vunpack.c.l.b16 %v917
        %v962 = vunpack.c.l.b16 %v918
        %v963 = vunpack.c.h.b16 %v917
        %v964 = vunpack.c.h.b16 %v918
        %v965 = vunpack.c.l.b16 %v919
        %v966 = vunpack.c.l.b16 %v920
        %v967 = vunpack.c.h.b16 %v919
        %v968 = vunpack.c.h.b16 %v920
        %v969 = vpack.c.b16 %v938, %v937
        %v970 = vpack.c.b16 %v940, %v939
        %v971 = vpack.c.b16 %v942, %v941
        %v972 = vpack.c.b16 %v944, %v943
        %v973 = vpack.c.b16 %v946, %v945
        %v974 = vpack.c.b16 %v948, %v947
        %v975 = vpack.c.b16 %v950, %v949
        %v976 = vpack.c.b16 %v952, %v951
        %v977 = vpack.c.b16 %v954, %v953
        %v978 = vpack.c.b16 %v956, %v955
        %v979 = vpack.c.b16 %v958, %v957
        %v980 = vpack.c.b16 %v960, %v959
        %v981 = vpack.c.b16 %v962, %v961
        %v982 = vpack.c.b16 %v964, %v963
        %v983 = vpack.c.b16 %v966, %v965
        %v984 = vpack.c.b16 %v968, %v967
        %1001 = vst [vmem:[%s192] sm:$0xff] %v969
        %1002 = vst [vmem:[%s192 + $0x8] sm:$0xff] %v970
        %1003 = vst [vmem:[%s192 + $0x10] sm:$0xff] %v971
        %1004 = vst [vmem:[%s192 + $0x18] sm:$0xff] %v972
        %1005 = vst [vmem:[%s192 + $0x20] sm:$0xff] %v973
        %1006 = vst [vmem:[%s192 + $0x28] sm:$0xff] %v974
        %1007 = vst [vmem:[%s192 + $0x30] sm:$0xff] %v975
        %1008 = vst [vmem:[%s192 + $0x38] sm:$0xff] %v976
        %1009 = vst [vmem:[%s192 + $0x40] sm:$0xff] %v977
        %1010 = vst [vmem:[%s192 + $0x48] sm:$0xff] %v978
        %1011 = vst [vmem:[%s192 + $0x50] sm:$0xff] %v979
        %1012 = vst [vmem:[%s192 + $0x58] sm:$0xff] %v980
        %1013 = vst [vmem:[%s192 + $0x60] sm:$0xff] %v981
        %1014 = vst [vmem:[%s192 + $0x68] sm:$0xff] %v982
        %1015 = vst [vmem:[%s192 + $0x70] sm:$0xff] %v983
        %1016 = vst [vmem:[%s192 + $0x78] sm:$0xff] %v984
        %v1017 = vadd.f32 %v827, %v831
        %v1018 = vadd.f32 %v1017, %v837
        %v1019 = vadd.f32 %v1018, %v841
        %v1020 = vadd.f32 %v1019, %v847
        %v1021 = vadd.f32 %v1020, %v851
        %v1022 = vadd.f32 %v1021, %v857
        %v1023 = vadd.f32 %v1022, %v861
        %v1024 = vadd.f32 %v1023, %v867
        %v1025 = vadd.f32 %v1024, %v871
        %v1026 = vadd.f32 %v1025, %v877
        %v1027 = vadd.f32 %v1026, %v881
        %v1028 = vadd.f32 %v1027, %v887
        %v1029 = vadd.f32 %v1028, %v891
        %v1030 = vadd.f32 %v1029, %v897
        %v1031 = vadd.f32 %v1030, %v901
        %v1032 = vrot.slane %v1031, 4
        %v1033 = vadd.f32 %v1031, %v1032
        %v1034 = vrot.slane %v1033, 2
        %v1035 = vadd.f32 %v1033, %v1034
        %v1036 = vrot.slane %v1035, 1
        %v1037 = vadd.f32 %v1035, %v1036
        %v1038 = vadd.f32 %v829, %v833
        %v1039 = vadd.f32 %v1038, %v839
        %v1040 = vadd.f32 %v1039, %v843
        %v1041 = vadd.f32 %v1040, %v849
        %v1042 = vadd.f32 %v1041, %v853
        %v1043 = vadd.f32 %v1042, %v859
        %v1044 = vadd.f32 %v1043, %v863
        %v1045 = vadd.f32 %v1044, %v869
        %v1046 = vadd.f32 %v1045, %v873
        %v1047 = vadd.f32 %v1046, %v879
        %v1048 = vadd.f32 %v1047, %v883
        %v1049 = vadd.f32 %v1048, %v889
        %v1050 = vadd.f32 %v1049, %v893
        %v1051 = vadd.f32 %v1050, %v899
        %v1052 = vadd.f32 %v1051, %v903
        %v1053 = vrot.slane %v1052, 4
        %v1054 = vadd.f32 %v1052, %v1053
        %v1055 = vrot.slane %v1054, 2
        %v1056 = vadd.f32 %v1054, %v1055
        %v1057 = vrot.slane %v1056, 1
        %v1058 = vadd.f32 %v1056, %v1057
        %v1059 = vmul.f32 %v827, %v827
        %v1060 = vmul.f32 %v829, %v829
        %v1061 = vmul.f32 %v831, %v831
        %v1062 = vmul.f32 %v833, %v833
        %v1063 = vmul.f32 %v837, %v837
        %v1064 = vmul.f32 %v839, %v839
        %v1065 = vmul.f32 %v841, %v841
        %v1066 = vmul.f32 %v843, %v843
        %v1067 = vmul.f32 %v847, %v847
        %v1068 = vmul.f32 %v849, %v849
        %v1069 = vmul.f32 %v851, %v851
        %v1070 = vmul.f32 %v853, %v853
        %v1071 = vmul.f32 %v857, %v857
        %v1072 = vmul.f32 %v859, %v859
        %v1073 = vmul.f32 %v861, %v861
        %v1074 = vmul.f32 %v863, %v863
        %v1075 = vmul.f32 %v867, %v867
        %v1076 = vmul.f32 %v869, %v869
        %v1077 = vmul.f32 %v871, %v871
        %v1078 = vmul.f32 %v873, %v873
        %v1079 = vmul.f32 %v877, %v877
        %v1080 = vmul.f32 %v879, %v879
        %v1081 = vmul.f32 %v881, %v881
        %v1082 = vmul.f32 %v883, %v883
        %v1083 = vmul.f32 %v887, %v887
        %v1084 = vmul.f32 %v889, %v889
        %v1085 = vmul.f32 %v891, %v891
        %v1086 = vmul.f32 %v893, %v893
        %v1087 = vmul.f32 %v897, %v897
        %v1088 = vmul.f32 %v899, %v899
        %v1089 = vmul.f32 %v901, %v901
        %v1090 = vmul.f32 %v903, %v903
        %v1091 = vadd.f32 %v1059, %v1061
        %v1092 = vadd.f32 %v1091, %v1063
        %v1093 = vadd.f32 %v1092, %v1065
        %v1094 = vadd.f32 %v1093, %v1067
        %v1095 = vadd.f32 %v1094, %v1069
        %v1096 = vadd.f32 %v1095, %v1071
        %v1097 = vadd.f32 %v1096, %v1073
        %v1098 = vadd.f32 %v1097, %v1075
        %v1099 = vadd.f32 %v1098, %v1077
        %v1100 = vadd.f32 %v1099, %v1079
        %v1101 = vadd.f32 %v1100, %v1081
        %v1102 = vadd.f32 %v1101, %v1083
        %v1103 = vadd.f32 %v1102, %v1085
        %v1104 = vadd.f32 %v1103, %v1087
        %v1105 = vadd.f32 %v1104, %v1089
        %v1106 = vrot.slane %v1105, 4
        %v1107 = vadd.f32 %v1105, %v1106
        %v1108 = vrot.slane %v1107, 2
        %v1109 = vadd.f32 %v1107, %v1108
        %v1110 = vrot.slane %v1109, 1
        %v1111 = vadd.f32 %v1109, %v1110
        %v1112 = vadd.f32 %v1060, %v1062
        %v1113 = vadd.f32 %v1112, %v1064
        %v1114 = vadd.f32 %v1113, %v1066
        %v1115 = vadd.f32 %v1114, %v1068
        %v1116 = vadd.f32 %v1115, %v1070
        %v1117 = vadd.f32 %v1116, %v1072
        %v1118 = vadd.f32 %v1117, %v1074
        %v1119 = vadd.f32 %v1118, %v1076
        %v1120 = vadd.f32 %v1119, %v1078
        %v1121 = vadd.f32 %v1120, %v1080
        %v1122 = vadd.f32 %v1121, %v1082
        %v1123 = vadd.f32 %v1122, %v1084
        %v1124 = vadd.f32 %v1123, %v1086
        %v1125 = vadd.f32 %v1124, %v1088
        %v1126 = vadd.f32 %v1125, %v1090
        %v1127 = vrot.slane %v1126, 4
        %v1128 = vadd.f32 %v1126, %v1127
        %v1129 = vrot.slane %v1128, 2
        %v1130 = vadd.f32 %v1128, %v1129
        %v1131 = vrot.slane %v1130, 1
        %v1132 = vadd.f32 %v1130, %v1131
        %v1133 = vld [vmem:[%s3] sm:$0xf]
        %vm1134 = vcmask 1040384
        %v1135 = vsel %vm1134, %v1037, %v1111
        %v1136 = vsel %vm1134, %v1058, %v1132
        %v1139 = vcombine.low %v1135, %v1136
        %v1141 = vunpack.c.l.s4 1983009808
        %v1142 = vunpack.c.0.s8 %v1141
        %v1143 = vlaneseq
        %v1144 = vshrl.u32 %v1143, 7
        %v1145 = vsub.s32 %v1142, %v1144
        %v1146 = vrot.slane %v1139, %v1145
        %v1148 = vadd.f32 %v1133, %v1146
        %1149 = vst [vmem:[%s3] sm:$0xf] %v1148
        %s1150 = smul.u32 16, %s18
        %p1151 = scmp.lt.s32.totalorder %s1150, 63
        %s1152 = scalar_select %p1151, %s1150, 63
        %s1153 = smul.addr %s1152, 2
        %s1154 = smul.addr %s1153, 4
        %s1155 = scalar_lea.vmem %s2, %s1154
        // Predicated region
        $region37: #{branch_forward.3} parent=27 // pred_check
          %p1156 = pneg %p83
        $region38: #{branch_forward.3} parent=27 // pred_check_branch
          %1158 = sbr.rel (%p1156) target = $region40
        $region39: #{branch_forward.3} parent=27 // pred_region
          %s1159 = smul.u32 16, %s18
        $region40: #{branch_forward.3} parent=27 // pred_fallthru
          _
        // Predicated region
        $region41: #{branch_forward.3} parent=27 // pred_check
          %p1160 = pneg %p104
        $region42: #{branch_forward.3} parent=27 // pred_check_branch
          %1162 = sbr.rel (%p1160) target = $region44
        $region43: #{branch_forward.3} parent=27 // pred_region
          _
        $region44: #{branch_forward.3} parent=27 // pred_fallthru
          _
        // Predicated region
        $region45: #{branch_forward.3} parent=27 // pred_check
          %p1163 = pneg %p104
        $region46: #{branch_forward.3} parent=27 // pred_check_branch
          %1165 = sbr.rel (%p1163) target = $region48
        $region47: #{branch_forward.3} parent=27 // pred_region
          _
        $region48: #{branch_forward.3} parent=27 // pred_fallthru
          _
      $region28: #{branch_forward.3} parent=5 // pred_fallthru
        _
      %p1166 = scmp.le.s32.totalorder 2, %s13
      // Predicated region
      $region49: #{branch_forward.3} parent=5 // pred_check
        %p1167 = pneg %p1166
      $region50: #{branch_forward.3} parent=5 // pred_check_branch
        %1169 = sbr.rel (%p1167) target = $region52
      $region51: #{branch_forward.3} parent=5 // pred_region
        %s1170 = ssub.s32 %s13, 2
        // Predicated region
        $region53: #{branch_forward.3} parent=51 // pred_check
          %p1171 = pneg %p89
        $region54: #{branch_forward.3} parent=51 // pred_check_branch
          %1173 = sbr.rel (%p1171) target = $region56
        $region55: #{branch_forward.3} parent=51 // pred_region
          %s1174 = smul.u32 16, %s19
          %p1175 = scmp.lt.s32.totalorder %s1174, 63
          %s1176 = scalar_select %p1175, %s1174, 63
          %s1177 = smul.addr %s1176, 2
          %s1178 = smul.addr %s1177, 4
          %s1179 = scalar_lea.vmem %s2, %s1178
        $region56: #{branch_forward.3} parent=51 // pred_fallthru
          _
      $region52: #{branch_forward.3} parent=5 // pred_fallthru
        _
    $region6: #{branch_forward.3} parent=1 // loop_footer
      %s17 = sadd.s32 1, %s13
    $region7: #{branch_forward.3} parent=1 // loop_footer_branch
      %12 = sbr.rel target = $region3
    $region8: #{branch_forward.3} parent=1 // loop_exit
      _
    %1180 = vsyncpa [#allocation3], 1
    %s1181 = scalar_lea.sflag [#allocation3], 1
    %1182 = vsyncpa %s1181, 1

</llo_original>
